<compile_context>
chip_gen: v6e
topology: v6e:2x2x1
jax: 0.10.0
libtpu: 0.0.40
codegen_flags: <defaults>
</compile_context>

<pallas_src>
import functools

import numpy as np
import jax
import jax.numpy as jnp
from jax import lax
from jax.experimental import pallas as pl
from jax.experimental.pallas import tpu as pltpu

NEG_INF = -1e30


def _round_up(x, m):
    return ((x + m - 1) // m) * m


def _tpu_kind():
    try:
        return jax.devices()[0].device_kind.lower()
    except Exception:
        return ""


def _fusion_clam_kernel(
    x0_ref,           # (TILE_N, d0)       f32   streamed, branch 0
    x1_ref,           # (TILE_N, d1)       f32   streamed, branch 1
    wp0_ref,          # (d0, Ep)           bf16  fw0 * W_proj0
    bp0_ref,          # (1, Ep)            f32   fw0 * b_proj0
    wa0_ref,          # (1, Ep)            f32   w_attn0 / fw0
    wp1_ref,          # (d1, Ep)           bf16
    bp1_ref,          # (1, Ep)            f32
    wa1_ref,          # (1, Ep)            f32
    ba_ref,           # (1, 2)             f32   [b_attn0, b_attn1]
    wfc_ref,          # (Ep, Lp)           bf16
    bfc_ref,          # (1, Lp)            f32
    wab_ref,          # (Lp, 2*Dp)         bf16  [w_a | w_b]
    bab_ref,          # (1, 2*Dp)          f32
    wc_ref,           # (Dp, Cp)           bf16
    bc_ref,           # (Cp, 1)            f32
    araw_ref,         # out: (Cp, TILE_N)  f32   raw attention logits (masked)
    m_ref,            # out: (1, Cp, 1)    f32   per-core running max
    l_ref,            # out: (1, Cp, 1)    f32   per-core running denom
    macc_ref,         # out: (1, Cp, Lp)   f32   per-core sum exp(s) * h
    *, n_valid, tile_n, tiles_per_core, d_pad, needs_mask,
):
    f32, bf16 = jnp.float32, jnp.bfloat16
    s = pl.program_id(0)                 # core-split axis ("parallel")
    i = pl.program_id(1)                 # instance-tile axis ("arbitrary")
    gtile = s * tiles_per_core + i       # global instance-tile index

    @pl.when(i == 0)
    def _init():
        m_ref[...] = jnp.full(m_ref.shape, NEG_INF, f32)
        l_ref[...] = jnp.zeros(l_ref.shape, f32)
        macc_ref[...] = jnp.zeros(macc_ref.shape, f32)

    # --- per-branch projection (bf16 MXU, f32 accumulation) -------------------
    x0 = x0_ref[...].astype(bf16)
    x1 = x1_ref[...].astype(bf16)
    proj0 = jnp.dot(x0, wp0_ref[...], preferred_element_type=f32) + bp0_ref[...]
    proj1 = jnp.dot(x1, wp1_ref[...], preferred_element_type=f32) + bp1_ref[...]

    # --- per-branch sigmoid attention scores on VPU + lane reduce --------------
    ba = ba_ref[...]                                                   # (1, 2)
    s0 = jax.nn.sigmoid(
        jnp.sum(proj0 * wa0_ref[...], axis=-1, keepdims=True) + ba[:, 0:1])
    s1 = jax.nn.sigmoid(
        jnp.sum(proj1 * wa1_ref[...], axis=-1, keepdims=True) + ba[:, 1:2])

    # --- 'add' fusion: softmax(fusion_w) already folded into wp/bp -------------
    fused = proj0 * s0 + proj1 * s1                                    # (T, Ep)

    # --- CLAM head: fc -> gated attention (a/b fused into one matmul) ----------
    h = jnp.maximum(
        jnp.dot(fused.astype(bf16), wfc_ref[...],
                preferred_element_type=f32) + bfc_ref[...], 0.0)       # (T, Lp)
    if needs_mask:
        # zero padded / garbage rows so they cannot contaminate macc (0 * NaN)
        row = gtile * tile_n + lax.broadcasted_iota(jnp.int32, (tile_n, 1), 0)
        h = jnp.where(row < n_valid, h, 0.0)

    g = jnp.dot(h.astype(bf16), wab_ref[...],
                preferred_element_type=f32) + bab_ref[...]             # (T, 2Dp)
    ab = jnp.tanh(g[:, :d_pad]) * jax.nn.sigmoid(g[:, d_pad:])         # (T, Dp)

    # --- attention logits produced directly transposed: (Cp, T), lane-dense ----
    scores = lax.dot_general(
        wc_ref[...], ab.astype(bf16), (((0,), (1,)), ((), ())),
        preferred_element_type=f32) + bc_ref[...]                      # (Cp, T)
    if needs_mask:
        col = gtile * tile_n + lax.broadcasted_iota(jnp.int32, scores.shape, 1)
        scores = jnp.where(col < n_valid, scores, NEG_INF)
    araw_ref[...] = scores

    # --- online softmax over the instance axis (per-core partials) -------------
    m_prev = m_ref[0]                                                  # (Cp, 1)
    m_new = jnp.maximum(m_prev, jnp.max(scores, axis=-1, keepdims=True))
    alpha = jnp.exp(m_prev - m_new)
    p = jnp.exp(scores - m_new)                                        # (Cp, T)
    l_ref[0] = alpha * l_ref[0] + jnp.sum(p, axis=-1, keepdims=True)
    macc_ref[0] = alpha * macc_ref[0] + jnp.dot(
        p.astype(bf16), h.astype(bf16), preferred_element_type=f32)   # (Cp, Lp)
    m_ref[0] = m_new


def clam_mb_mil_fusion_forward(feature_list, params, tile_n=None):
    """feature_list: [x0 (n, d0), x1 (n, d1)] float32.  Returns dict of results.

    tile_n: instance-tile size (multiple of 128).  Defaults generation-aware:
    up to 512 on v7x (64 MiB VMEM), up to 1024 on v5e/v6e (128 MiB VMEM).
    """
    f32, bf16 = jnp.float32, jnp.bfloat16
    x0, x1 = feature_list
    n, d0 = x0.shape
    d1 = x1.shape[1]
    E = params["wp0"].shape[1]
    L = params["wfc"].shape[1]
    D = params["w_a"].shape[1]
    C = params["w_c"].shape[1]

    kind = _tpu_kind()
    is_v7 = ("v7" in kind) or ("7x" in kind)
    megacore = is_v7 or ("v4" in kind)

    if tile_n is None:
        cap = 512 if is_v7 else 1024
        tile_n = max(128, min(cap, _round_up(n, 128)))
    assert tile_n % 128 == 0, "tile_n must be a multiple of 128"

    # padded weight dims (lane / sublane aligned); the streamed x is NOT padded.
    Ep, Lp, Dp = _round_up(E, 128), _round_up(L, 128), _round_up(D, 128)
    Cp = max(8, _round_up(C, 8))

    n_tiles = -(-n // tile_n)
    split = 2 if (megacore and n_tiles >= 2) else 1
    tiles_per_core = -(-n_tiles // split)
    total_tiles = split * tiles_per_core
    n_pad = total_tiles * tile_n
    needs_mask = (n_pad != n)

    # --- fold softmax(fusion_weights) into the projection weights --------------
    fw = jax.nn.softmax(params["fusion_w"].reshape(-1).astype(f32))
    fw0, fw1 = fw[0], fw[1]

    def pad2(w, r, c):
        out = jnp.zeros((r, c), w.dtype)
        return out.at[: w.shape[0], : w.shape[1]].set(w)

    wp0p = pad2(params["wp0"].astype(f32) * fw0, d0, Ep).astype(bf16)
    bp0p = pad2(params["bp0"].astype(f32) * fw0, 1, Ep)
    wa0p = pad2((params["wa0"].astype(f32) / fw0).reshape(1, E), 1, Ep)
    wp1p = pad2(params["wp1"].astype(f32) * fw1, d1, Ep).astype(bf16)
    bp1p = pad2(params["bp1"].astype(f32) * fw1, 1, Ep)
    wa1p = pad2((params["wa1"].astype(f32) / fw1).reshape(1, E), 1, Ep)
    ba = jnp.concatenate([params["ba0"].reshape(1, 1),
                          params["ba1"].reshape(1, 1)], axis=1).astype(f32)

    wfcp = pad2(params["wfc"].astype(f32), Ep, Lp).astype(bf16)
    bfcp = pad2(params["bfc"].astype(f32), 1, Lp)

    wabp = jnp.zeros((Lp, 2 * Dp), bf16)
    wabp = wabp.at[:L, :D].set(params["w_a"].astype(bf16))
    wabp = wabp.at[:L, Dp:Dp + D].set(params["w_b"].astype(bf16))
    babp = jnp.zeros((1, 2 * Dp), f32)
    babp = babp.at[:, :D].set(params["b_a"])
    babp = babp.at[:, Dp:Dp + D].set(params["b_b"])

    wcp = pad2(params["w_c"].astype(f32), Dp, Cp).astype(bf16)
    bcp = jnp.zeros((Cp, 1), f32).at[:C, :].set(params["b_c"].reshape(C, 1))

    # --- block specs ------------------------------------------------------------
    tpc = tiles_per_core

    def wspec(shape):
        # constant block index -> resident weight; single-buffered (no waste).
        return pl.BlockSpec(shape, lambda s, i: (0,) * len(shape),
                            pipeline_mode=pl.Buffered(1))

    x0_spec = pl.BlockSpec((tile_n, d0), lambda s, i: (s * tpc + i, 0))
    x1_spec = pl.BlockSpec((tile_n, d1), lambda s, i: (s * tpc + i, 0))
    araw_spec = pl.BlockSpec((Cp, tile_n), lambda s, i: (0, s * tpc + i))
    part_spec = pl.BlockSpec((1, Cp, 1), lambda s, i: (s, 0, 0))
    macc_spec = pl.BlockSpec((1, Cp, Lp), lambda s, i: (s, 0, 0))

    # --- generation-aware VMEM budget -------------------------------------------
    bytes_x = 2 * tile_n * (d0 + d1) * 4                 # double-buffered f32 stream
    bytes_w = (d0 * Ep + d1 * Ep + Ep * Lp + Lp * 2 * Dp + Dp * Cp) * 2
    bytes_out = 2 * Cp * tile_n * 4 + (Cp * Lp + 2 * Cp) * 4
    bytes_mid = tile_n * (2 * Ep + Lp + 2 * Dp + Cp + 8) * 4 * 2
    est = bytes_x + bytes_w + bytes_out + bytes_mid
    vmem_cap = (44 if is_v7 else 100) * 1024 * 1024
    vmem_limit = int(min(vmem_cap, max(32 * 1024 * 1024, 2 * est)))

    kern = functools.partial(
        _fusion_clam_kernel,
        n_valid=n, tile_n=tile_n, tiles_per_core=tiles_per_core,
        d_pad=Dp, needs_mask=needs_mask)

    araw, m_p, l_p, macc_p = pl.pallas_call(
        kern,
        out_shape=(jax.ShapeDtypeStruct((Cp, n_pad), f32),
                   jax.ShapeDtypeStruct((split, Cp, 1), f32),
                   jax.ShapeDtypeStruct((split, Cp, 1), f32),
                   jax.ShapeDtypeStruct((split, Cp, Lp), f32)),
        grid=(split, tiles_per_core),
        in_specs=[
            x0_spec, x1_spec,
            wspec((d0, Ep)), wspec((1, Ep)), wspec((1, Ep)),
            wspec((d1, Ep)), wspec((1, Ep)), wspec((1, Ep)),
            wspec((1, 2)),
            wspec((Ep, Lp)), wspec((1, Lp)),
            wspec((Lp, 2 * Dp)), wspec((1, 2 * Dp)),
            wspec((Dp, Cp)), wspec((Cp, 1)),
        ],
        out_specs=(araw_spec, part_spec, part_spec, macc_spec),
        compiler_params=pltpu.CompilerParams(
            dimension_semantics=("parallel", "arbitrary"),
            vmem_limit_bytes=vmem_limit),
    )(x0, x1, wp0p, bp0p, wa0p, wp1p, bp1p, wa1p, ba,
      wfcp, bfcp, wabp, babp, wcp, bcp)

    # --- merge per-core online-softmax partials (tiny, f32) ---------------------
    m_tot = jnp.max(m_p, axis=0)                                   # (Cp, 1)
    scale = jnp.exp(m_p - m_tot[None])                             # (split, Cp, 1)
    l_tot = jnp.sum(l_p * scale, axis=0)                           # (Cp, 1)
    Macc = jnp.sum(macc_p * scale, axis=0)                         # (Cp, Lp)
    M = (Macc / l_tot)[:C, :L]                                     # (C, L)

    logits = (jnp.sum(M * params["wcls"], axis=-1)
              + params["bcls"].reshape(-1))[None, :]               # (1, C)
    y_prob = jax.nn.softmax(logits, axis=-1)
    y_hat = jnp.argmax(logits, axis=-1)
    A = jax.nn.softmax(araw[:C, :n], axis=-1)                      # (C, n)
    return {"logits": logits, "Y_prob": y_prob, "Y_hat": y_hat, "A": A}


def _reference_forward(feature_list, p):
    """Pure-JAX f32 reference for validation."""
    x0, x1 = feature_list
    proj0 = x0 @ p["wp0"] + p["bp0"]
    pa0 = proj0 * jax.nn.sigmoid(proj0 @ p["wa0"] + p["ba0"])
    proj1 = x1 @ p["wp1"] + p["bp1"]
    pa1 = proj1 * jax.nn.sigmoid(proj1 @ p["wa1"] + p["ba1"])
    fw = jax.nn.softmax(p["fusion_w"].reshape(-1))
    fused = fw[0] * pa0 + fw[1] * pa1
    h = jax.nn.relu(fused @ p["wfc"] + p["bfc"])
    a = jnp.tanh(h @ p["w_a"] + p["b_a"])
    b = jax.nn.sigmoid(h @ p["w_b"] + p["b_b"])
    A = jax.nn.softmax((a * b @ p["w_c"] + p["b_c"]).T, axis=-1)
    M = A @ h
    logits = (jnp.sum(M * p["wcls"], axis=-1, keepdims=True)).T + p["bcls"]
    return logits, jax.nn.softmax(logits, axis=-1), A


if __name__ == "__main__":
    # small shapes consistent with the module's forward (deliberately not
    # 128-aligned to exercise the no-pad streaming + last-tile masking path, and
    # n > tile_n to exercise the multi-step online softmax)
    n = 200               # instances per bag
    d0, d1 = 96, 160      # per-branch input feature dims
    E = 64                # embed_dim
    L, D = 64, 48         # CLAM hidden sizes (scaled down)
    C = 2                 # num_classes

    key = jax.random.PRNGKey(0)
    ks = jax.random.split(key, 24)
    f32 = jnp.float32

    def init(k, shape, scale):
        return (scale * jax.random.normal(k, shape)).astype(f32)

    params = {
        # branch 0 projection + attention
        "wp0": init(ks[0], (d0, E), 1.0 / np.sqrt(d0)),
        "bp0": init(ks[1], (1, E), 0.01),
        "wa0": init(ks[2], (E, 1), 1.0 / np.sqrt(E)),
        "ba0": init(ks[3], (1, 1), 0.01),
        # branch 1 projection + attention
        "wp1": init(ks[4], (d1, E), 1.0 / np.sqrt(d1)),
        "bp1": init(ks[5], (1, E), 0.01),
        "wa1": init(ks[6], (E, 1), 1.0 / np.sqrt(E)),
        "ba1": init(ks[7], (1, 1), 0.01),
        # fusion weights (module inits to ones)
        "fusion_w": jnp.ones((2,), dtype=f32),
        # CLAM fc
        "wfc": init(ks[8], (E, L), 1.0 / np.sqrt(E)),
        "bfc": init(ks[9], (1, L), 0.01),
        # gated attention net
        "w_a": init(ks[10], (L, D), 1.0 / np.sqrt(L)),
        "b_a": init(ks[11], (1, D), 0.01),
        "w_b": init(ks[12], (L, D), 1.0 / np.sqrt(L)),
        "b_b": init(ks[13], (1, D), 0.01),
        "w_c": init(ks[14], (D, C), 1.0 / np.sqrt(D)),
        "b_c": init(ks[15], (1, C), 0.01),
        # per-class bag classifiers stacked: row c = weights of classifier c
        "wcls": init(ks[16], (C, L), 1.0 / np.sqrt(L)),
        "bcls": init(ks[17], (1, C), 0.01),
    }

    x0 = jax.random.normal(ks[18], (n, d0)).astype(f32)
    x1 = jax.random.normal(ks[19], (n, d1)).astype(f32)

    out = clam_mb_mil_fusion_forward([x0, x1], params, tile_n=128)
    jax.block_until_ready(out)

    ref_logits, ref_prob, ref_A = _reference_forward([x0, x1], params)
    ok = (
        np.allclose(np.asarray(out["logits"]), np.asarray(ref_logits),
                    atol=5e-2, rtol=5e-2)
        and np.allclose(np.asarray(out["Y_prob"]), np.asarray(ref_prob),
                        atol=2e-2, rtol=5e-2)
        and np.allclose(np.asarray(out["A"]), np.asarray(ref_A),
                        atol=1e-2, rtol=5e-2)
    )
    if not ok:
        raise AssertionError("Pallas kernel output mismatch vs JAX reference")
    print("KERNEL_OK")
</pallas_src>

<mosaic_0001>
module attributes {stable_mosaic.version = 11 : i64} {
  func.func @_fusion_clam_kernel(%arg0: i32, %arg1: i32, %arg2: memref<128x96xf32, #tpu.memory_space<vmem>>, %arg3: memref<128x160xf32, #tpu.memory_space<vmem>>, %arg4: memref<96x128xbf16, #tpu.memory_space<vmem>>, %arg5: memref<1x128xf32, #tpu.memory_space<vmem>>, %arg6: memref<1x128xf32, #tpu.memory_space<vmem>>, %arg7: memref<160x128xbf16, #tpu.memory_space<vmem>>, %arg8: memref<1x128xf32, #tpu.memory_space<vmem>>, %arg9: memref<1x128xf32, #tpu.memory_space<vmem>>, %arg10: memref<1x2xf32, #tpu.memory_space<vmem>>, %arg11: memref<128x128xbf16, #tpu.memory_space<vmem>>, %arg12: memref<1x128xf32, #tpu.memory_space<vmem>>, %arg13: memref<128x256xbf16, #tpu.memory_space<vmem>>, %arg14: memref<1x256xf32, #tpu.memory_space<vmem>>, %arg15: memref<128x8xbf16, #tpu.memory_space<vmem>>, %arg16: memref<8x1xf32, #tpu.memory_space<vmem>>, %arg17: memref<8x128xf32, #tpu.memory_space<vmem>>, %arg18: memref<1x8x1xf32, #tpu.memory_space<vmem>>, %arg19: memref<1x8x1xf32, #tpu.memory_space<vmem>>, %arg20: memref<1x8x128xf32, #tpu.memory_space<vmem>>) attributes {dimension_semantics = [#tpu.dimension_semantics<parallel>, #tpu.dimension_semantics<arbitrary>], iteration_bounds = array<i64: 1, 2>, scalar_prefetch = 0 : i64, scratch_operands = 0 : i64, tpu.core_type = #tpu.core_type<tc>, window_params = [{transform_indices = @transform_0, window_bounds = array<i64: 128, 96>}, {transform_indices = @transform_1, window_bounds = array<i64: 128, 160>}, {pipeline_mode = #tpu.pipeline_mode<synchronous>, transform_indices = @transform_2, window_bounds = array<i64: 96, 128>}, {pipeline_mode = #tpu.pipeline_mode<synchronous>, transform_indices = @transform_3, window_bounds = array<i64: 1, 128>}, {pipeline_mode = #tpu.pipeline_mode<synchronous>, transform_indices = @transform_4, window_bounds = array<i64: 1, 128>}, {pipeline_mode = #tpu.pipeline_mode<synchronous>, transform_indices = @transform_5, window_bounds = array<i64: 160, 128>}, {pipeline_mode = #tpu.pipeline_mode<synchronous>, transform_indices = @transform_6, window_bounds = array<i64: 1, 128>}, {pipeline_mode = #tpu.pipeline_mode<synchronous>, transform_indices = @transform_7, window_bounds = array<i64: 1, 128>}, {pipeline_mode = #tpu.pipeline_mode<synchronous>, transform_indices = @transform_8, window_bounds = array<i64: 1, 2>}, {pipeline_mode = #tpu.pipeline_mode<synchronous>, transform_indices = @transform_9, window_bounds = array<i64: 128, 128>}, {pipeline_mode = #tpu.pipeline_mode<synchronous>, transform_indices = @transform_10, window_bounds = array<i64: 1, 128>}, {pipeline_mode = #tpu.pipeline_mode<synchronous>, transform_indices = @transform_11, window_bounds = array<i64: 128, 256>}, {pipeline_mode = #tpu.pipeline_mode<synchronous>, transform_indices = @transform_12, window_bounds = array<i64: 1, 256>}, {pipeline_mode = #tpu.pipeline_mode<synchronous>, transform_indices = @transform_13, window_bounds = array<i64: 128, 8>}, {pipeline_mode = #tpu.pipeline_mode<synchronous>, transform_indices = @transform_14, window_bounds = array<i64: 8, 1>}, {transform_indices = @transform_15, window_bounds = array<i64: 8, 128>}, {transform_indices = @transform_16, window_bounds = array<i64: 1, 8, 1>}, {transform_indices = @transform_17, window_bounds = array<i64: 1, 8, 1>}, {transform_indices = @transform_18, window_bounds = array<i64: 1, 8, 128>}]} {
    %c2_i32 = arith.constant 2 : i32
    %0 = arith.muli %arg0, %c2_i32 : i32
    %1 = arith.addi %0, %arg1 : i32
    %c0_i32 = arith.constant 0 : i32
    %2 = arith.cmpi eq, %arg1, %c0_i32 : i32
    %3 = arith.extui %2 : i1 to i32
    %c0_i32_0 = arith.constant 0 : i32
    %4 = arith.cmpi ne, %3, %c0_i32_0 : i32
    scf.if %4 {
      %cst_67 = arith.constant -1.000000e+30 : f32
      %132 = vector.broadcast %cst_67 : f32 to vector<1x8x1xf32>
      %c0_68 = arith.constant 0 : index
      %c0_69 = arith.constant 0 : index
      %c0_70 = arith.constant 0 : index
      %133 = vector.load %arg18[%c0_68, %c0_69, %c0_70] : memref<1x8x1xf32, #tpu.memory_space<vmem>>, vector<1x8x1xf32>
      tpu.vector_store %arg18[%c0_68, %c0_69, %c0_70], %132 {strides = array<i32>} : memref<1x8x1xf32, #tpu.memory_space<vmem>>, vector<1x8x1xf32>,
      %cst_71 = arith.constant 0.000000e+00 : f32
      %134 = vector.broadcast %cst_71 : f32 to vector<1x8x1xf32>
      %c0_72 = arith.constant 0 : index
      %c0_73 = arith.constant 0 : index
      %c0_74 = arith.constant 0 : index
      %135 = vector.load %arg19[%c0_72, %c0_73, %c0_74] : memref<1x8x1xf32, #tpu.memory_space<vmem>>, vector<1x8x1xf32>
      tpu.vector_store %arg19[%c0_72, %c0_73, %c0_74], %134 {strides = array<i32>} : memref<1x8x1xf32, #tpu.memory_space<vmem>>, vector<1x8x1xf32>,
      %cst_75 = arith.constant 0.000000e+00 : f32
      %136 = vector.broadcast %cst_75 : f32 to vector<1x8x128xf32>
      %c0_76 = arith.constant 0 : index
      %c0_77 = arith.constant 0 : index
      %c0_78 = arith.constant 0 : index
      %137 = vector.load %arg20[%c0_76, %c0_77, %c0_78] : memref<1x8x128xf32, #tpu.memory_space<vmem>>, vector<1x8x128xf32>
      tpu.vector_store %arg20[%c0_76, %c0_77, %c0_78], %136 {strides = array<i32>} : memref<1x8x128xf32, #tpu.memory_space<vmem>>, vector<1x8x128xf32>,
    } else {
    }
    %c0 = arith.constant 0 : index
    %c0_1 = arith.constant 0 : index
    %5 = vector.load %arg2[%c0, %c0_1] : memref<128x96xf32, #tpu.memory_space<vmem>>, vector<128x96xf32>
    %6 = arith.truncf %5 : vector<128x96xf32> to vector<128x96xbf16>
    %c0_2 = arith.constant 0 : index
    %c0_3 = arith.constant 0 : index
    %7 = vector.load %arg3[%c0_2, %c0_3] : memref<128x160xf32, #tpu.memory_space<vmem>>, vector<128x160xf32>
    %8 = arith.truncf %7 : vector<128x160xf32> to vector<128x160xbf16>
    %c0_4 = arith.constant 0 : index
    %c0_5 = arith.constant 0 : index
    %9 = vector.load %arg4[%c0_4, %c0_5] : memref<96x128xbf16, #tpu.memory_space<vmem>>, vector<96x128xbf16>
    %cst = arith.constant dense<0.000000e+00> : vector<128x128xf32>
    %10 = tpu.matmul %6, %9, %cst {dimension_numbers = #tpu.dot_dimension_numbers<[1], [0], [0], [1], [0, 0, 1, 1], [], []>} : vector<128x96xbf16>, vector<96x128xbf16>, vector<128x128xf32> -> vector<128x128xf32>
    %c0_6 = arith.constant 0 : index
    %c0_7 = arith.constant 0 : index
    %11 = vector.load %arg5[%c0_6, %c0_7] : memref<1x128xf32, #tpu.memory_space<vmem>>, vector<1x128xf32>
    %12 = vector.broadcast %11 : vector<1x128xf32> to vector<128x128xf32>
    %13 = arith.addf %10, %12 : vector<128x128xf32>
    %c0_8 = arith.constant 0 : index
    %c0_9 = arith.constant 0 : index
    %14 = vector.load %arg7[%c0_8, %c0_9] : memref<160x128xbf16, #tpu.memory_space<vmem>>, vector<160x128xbf16>
    %cst_10 = arith.constant dense<0.000000e+00> : vector<128x128xf32>
    %15 = tpu.matmul %8, %14, %cst_10 {dimension_numbers = #tpu.dot_dimension_numbers<[1], [0], [0], [1], [0, 0, 1, 1], [], []>} : vector<128x160xbf16>, vector<160x128xbf16>, vector<128x128xf32> -> vector<128x128xf32>
    %c0_11 = arith.constant 0 : index
    %c0_12 = arith.constant 0 : index
    %16 = vector.load %arg8[%c0_11, %c0_12] : memref<1x128xf32, #tpu.memory_space<vmem>>, vector<1x128xf32>
    %17 = vector.broadcast %16 : vector<1x128xf32> to vector<128x128xf32>
    %18 = arith.addf %15, %17 : vector<128x128xf32>
    %c0_13 = arith.constant 0 : index
    %c0_14 = arith.constant 0 : index
    %19 = vector.load %arg10[%c0_13, %c0_14] : memref<1x2xf32, #tpu.memory_space<vmem>>, vector<1x2xf32>
    %c0_15 = arith.constant 0 : index
    %c0_16 = arith.constant 0 : index
    %20 = vector.load %arg6[%c0_15, %c0_16] : memref<1x128xf32, #tpu.memory_space<vmem>>, vector<1x128xf32>
    %21 = vector.broadcast %20 : vector<1x128xf32> to vector<128x128xf32>
    %22 = arith.mulf %13, %21 : vector<128x128xf32>
    %cst_17 = arith.constant dense<0.000000e+00> : vector<128xf32>
    %23 = vector.multi_reduction <add>, %22, %cst_17 [1] : vector<128x128xf32> to vector<128xf32>
    %24 = vector.shape_cast %23 : vector<128xf32> to vector<128x1xf32>
    %25 = vector.extract_strided_slice %19 {offsets = [0, 0], sizes = [1, 1], strides = [1, 1]} : vector<1x2xf32> to vector<1x1xf32>
    %26 = vector.broadcast %25 : vector<1x1xf32> to vector<128x1xf32>
    %27 = arith.addf %24, %26 : vector<128x1xf32>
    %28 = arith.negf %27 : vector<128x1xf32>
    %29 = math.exp %28 : vector<128x1xf32>
    %cst_18 = arith.constant 1.000000e+00 : f32
    %30 = vector.broadcast %cst_18 : f32 to vector<128x1xf32>
    %31 = arith.addf %30, %29 : vector<128x1xf32>
    %32 = arith.divf %30, %31 : vector<128x1xf32>
    %c0_19 = arith.constant 0 : index
    %c0_20 = arith.constant 0 : index
    %33 = vector.load %arg9[%c0_19, %c0_20] : memref<1x128xf32, #tpu.memory_space<vmem>>, vector<1x128xf32>
    %34 = vector.broadcast %33 : vector<1x128xf32> to vector<128x128xf32>
    %35 = arith.mulf %18, %34 : vector<128x128xf32>
    %cst_21 = arith.constant dense<0.000000e+00> : vector<128xf32>
    %36 = vector.multi_reduction <add>, %35, %cst_21 [1] : vector<128x128xf32> to vector<128xf32>
    %37 = vector.shape_cast %36 : vector<128xf32> to vector<128x1xf32>
    %38 = vector.extract_strided_slice %19 {offsets = [0, 1], sizes = [1, 1], strides = [1, 1]} : vector<1x2xf32> to vector<1x1xf32>
    %39 = vector.broadcast %38 : vector<1x1xf32> to vector<128x1xf32>
    %40 = arith.addf %37, %39 : vector<128x1xf32>
    %41 = arith.negf %40 : vector<128x1xf32>
    %42 = math.exp %41 : vector<128x1xf32>
    %cst_22 = arith.constant 1.000000e+00 : f32
    %43 = vector.broadcast %cst_22 : f32 to vector<128x1xf32>
    %44 = arith.addf %43, %42 : vector<128x1xf32>
    %45 = arith.divf %43, %44 : vector<128x1xf32>
    %46 = vector.broadcast %32 : vector<128x1xf32> to vector<128x128xf32>
    %47 = arith.mulf %13, %46 : vector<128x128xf32>
    %48 = vector.broadcast %45 : vector<128x1xf32> to vector<128x128xf32>
    %49 = arith.mulf %18, %48 : vector<128x128xf32>
    %50 = arith.addf %47, %49 : vector<128x128xf32>
    %51 = arith.truncf %50 : vector<128x128xf32> to vector<128x128xbf16>
    %c0_23 = arith.constant 0 : index
    %c0_24 = arith.constant 0 : index
    %52 = vector.load %arg11[%c0_23, %c0_24] : memref<128x128xbf16, #tpu.memory_space<vmem>>, vector<128x128xbf16>
    %cst_25 = arith.constant dense<0.000000e+00> : vector<128x128xf32>
    %53 = tpu.matmul %51, %52, %cst_25 {dimension_numbers = #tpu.dot_dimension_numbers<[1], [0], [0], [1], [0, 0, 1, 1], [], []>} : vector<128x128xbf16>, vector<128x128xbf16>, vector<128x128xf32> -> vector<128x128xf32>
    %c0_26 = arith.constant 0 : index
    %c0_27 = arith.constant 0 : index
    %54 = vector.load %arg12[%c0_26, %c0_27] : memref<1x128xf32, #tpu.memory_space<vmem>>, vector<1x128xf32>
    %55 = vector.broadcast %54 : vector<1x128xf32> to vector<128x128xf32>
    %56 = arith.addf %53, %55 : vector<128x128xf32>
    %cst_28 = arith.constant 0.000000e+00 : f32
    %57 = vector.broadcast %cst_28 : f32 to vector<128x128xf32>
    %58 = arith.maximumf %56, %57 : vector<128x128xf32>
    %c128_i32 = arith.constant 128 : i32
    %59 = arith.muli %1, %c128_i32 : i32
    %60 = tpu.iota {dimensions = array<i32: 0>} : vector<128x1xi32>
    %61 = vector.broadcast %59 : i32 to vector<128x1xi32>
    %62 = arith.addi %61, %60 : vector<128x1xi32>
    %c200_i32 = arith.constant 200 : i32
    %63 = vector.broadcast %c200_i32 : i32 to vector<128x1xi32>
    %64 = arith.cmpi slt, %62, %63 : vector<128x1xi32>
    %cst_29 = arith.constant 0.000000e+00 : f32
    %65 = vector.shape_cast %64 : vector<128x1xi1> to vector<128x1xi1>
    %66 = vector.broadcast %65 : vector<128x1xi1> to vector<128x128xi1>
    %67 = vector.broadcast %cst_29 : f32 to vector<128x128xf32>
    %68 = arith.select %66, %58, %67 : vector<128x128xi1>, vector<128x128xf32>
    %69 = arith.truncf %68 : vector<128x128xf32> to vector<128x128xbf16>
    %c0_30 = arith.constant 0 : index
    %c0_31 = arith.constant 0 : index
    %70 = vector.load %arg13[%c0_30, %c0_31] : memref<128x256xbf16, #tpu.memory_space<vmem>>, vector<128x256xbf16>
    %cst_32 = arith.constant dense<0.000000e+00> : vector<128x256xf32>
    %71 = tpu.matmul %69, %70, %cst_32 {dimension_numbers = #tpu.dot_dimension_numbers<[1], [0], [0], [1], [0, 0, 1, 1], [], []>} : vector<128x128xbf16>, vector<128x256xbf16>, vector<128x256xf32> -> vector<128x256xf32>
    %c0_33 = arith.constant 0 : index
    %c0_34 = arith.constant 0 : index
    %72 = vector.load %arg14[%c0_33, %c0_34] : memref<1x256xf32, #tpu.memory_space<vmem>>, vector<1x256xf32>
    %73 = vector.broadcast %72 : vector<1x256xf32> to vector<128x256xf32>
    %74 = arith.addf %71, %73 : vector<128x256xf32>
    %75 = vector.extract_strided_slice %74 {offsets = [0, 0], sizes = [128, 128], strides = [1, 1]} : vector<128x256xf32> to vector<128x128xf32>
    %76 = math.tanh %75 : vector<128x128xf32>
    %77 = vector.extract_strided_slice %74 {offsets = [0, 128], sizes = [128, 128], strides = [1, 1]} : vector<128x256xf32> to vector<128x128xf32>
    %78 = arith.negf %77 : vector<128x128xf32>
    %79 = math.exp %78 : vector<128x128xf32>
    %cst_35 = arith.constant 1.000000e+00 : f32
    %80 = vector.broadcast %cst_35 : f32 to vector<128x128xf32>
    %81 = arith.addf %80, %79 : vector<128x128xf32>
    %82 = arith.divf %80, %81 : vector<128x128xf32>
    %83 = arith.mulf %76, %82 : vector<128x128xf32>
    %c0_36 = arith.constant 0 : index
    %c0_37 = arith.constant 0 : index
    %84 = vector.load %arg15[%c0_36, %c0_37] : memref<128x8xbf16, #tpu.memory_space<vmem>>, vector<128x8xbf16>
    %85 = arith.truncf %83 : vector<128x128xf32> to vector<128x128xbf16>
    %cst_38 = arith.constant dense<0.000000e+00> : vector<8x128xf32>
    %86 = tpu.matmul %84, %85, %cst_38 {dimension_numbers = #tpu.dot_dimension_numbers<[0], [1], [1], [0], [0, 1, 1, 0], [], []>} : vector<128x8xbf16>, vector<128x128xbf16>, vector<8x128xf32> -> vector<8x128xf32>
    %c0_39 = arith.constant 0 : index
    %c0_40 = arith.constant 0 : index
    %87 = vector.load %arg16[%c0_39, %c0_40] : memref<8x1xf32, #tpu.memory_space<vmem>>, vector<8x1xf32>
    %88 = vector.broadcast %87 : vector<8x1xf32> to vector<8x128xf32>
    %89 = arith.addf %86, %88 : vector<8x128xf32>
    %c128_i32_41 = arith.constant 128 : i32
    %90 = arith.muli %1, %c128_i32_41 : i32
    %91 = tpu.iota {dimensions = array<i32: 1>} : vector<8x128xi32>
    %92 = vector.broadcast %90 : i32 to vector<8x128xi32>
    %93 = arith.addi %92, %91 : vector<8x128xi32>
    %c200_i32_42 = arith.constant 200 : i32
    %94 = vector.broadcast %c200_i32_42 : i32 to vector<8x128xi32>
    %95 = arith.cmpi slt, %93, %94 : vector<8x128xi32>
    %cst_43 = arith.constant -1.000000e+30 : f32
    %96 = vector.broadcast %cst_43 : f32 to vector<8x128xf32>
    %97 = arith.select %95, %89, %96 : vector<8x128xi1>, vector<8x128xf32>
    %c0_44 = arith.constant 0 : index
    %c0_45 = arith.constant 0 : index
    %98 = vector.load %arg17[%c0_44, %c0_45] : memref<8x128xf32, #tpu.memory_space<vmem>>, vector<8x128xf32>
    tpu.vector_store %arg17[%c0_44, %c0_45], %97 {strides = array<i32>} : memref<8x128xf32, #tpu.memory_space<vmem>>, vector<8x128xf32>,
    %c0_46 = arith.constant 0 : index
    %c0_47 = arith.constant 0 : index
    %c0_48 = arith.constant 0 : index
    %99 = vector.load %arg18[%c0_46, %c0_47, %c0_48] : memref<1x8x1xf32, #tpu.memory_space<vmem>>, vector<1x8x1xf32>
    %100 = vector.shape_cast %99 : vector<1x8x1xf32> to vector<8x1xf32>
    %cst_49 = arith.constant dense<0xFF800000> : vector<8xf32>
    %101 = vector.multi_reduction <maximumf>, %97, %cst_49 [1] : vector<8x128xf32> to vector<8xf32>
    %102 = vector.shape_cast %101 : vector<8xf32> to vector<8x1xf32>
    %103 = arith.maximumf %100, %102 : vector<8x1xf32>
    %104 = arith.subf %100, %103 : vector<8x1xf32>
    %105 = math.exp %104 : vector<8x1xf32>
    %106 = vector.broadcast %103 : vector<8x1xf32> to vector<8x128xf32>
    %107 = arith.subf %97, %106 : vector<8x128xf32>
    %108 = math.exp %107 : vector<8x128xf32>
    %c0_50 = arith.constant 0 : index
    %c0_51 = arith.constant 0 : index
    %c0_52 = arith.constant 0 : index
    %109 = vector.load %arg19[%c0_50, %c0_51, %c0_52] : memref<1x8x1xf32, #tpu.memory_space<vmem>>, vector<1x8x1xf32>
    %110 = vector.shape_cast %109 : vector<1x8x1xf32> to vector<8x1xf32>
    %111 = arith.mulf %105, %110 : vector<8x1xf32>
    %cst_53 = arith.constant dense<0.000000e+00> : vector<8xf32>
    %112 = vector.multi_reduction <add>, %108, %cst_53 [1] : vector<8x128xf32> to vector<8xf32>
    %113 = vector.shape_cast %112 : vector<8xf32> to vector<8x1xf32>
    %114 = arith.addf %111, %113 : vector<8x1xf32>
    %c0_54 = arith.constant 0 : index
    %c0_55 = arith.constant 0 : index
    %c0_56 = arith.constant 0 : index
    %115 = vector.load %arg19[%c0_54, %c0_55, %c0_56] : memref<1x8x1xf32, #tpu.memory_space<vmem>>, vector<1x8x1xf32>
    %116 = vector.shape_cast %115 : vector<1x8x1xf32> to vector<8x1xf32>
    %117 = vector.shape_cast %114 : vector<8x1xf32> to vector<1x8x1xf32>
    tpu.vector_store %arg19[%c0_54, %c0_55, %c0_56], %117 {strides = array<i32>} : memref<1x8x1xf32, #tpu.memory_space<vmem>>, vector<1x8x1xf32>,
    %c0_57 = arith.constant 0 : index
    %c0_58 = arith.constant 0 : index
    %c0_59 = arith.constant 0 : index
    %118 = vector.load %arg20[%c0_57, %c0_58, %c0_59] : memref<1x8x128xf32, #tpu.memory_space<vmem>>, vector<1x8x128xf32>
    %119 = vector.shape_cast %118 : vector<1x8x128xf32> to vector<8x128xf32>
    %120 = vector.broadcast %105 : vector<8x1xf32> to vector<8x128xf32>
    %121 = arith.mulf %120, %119 : vector<8x128xf32>
    %122 = arith.truncf %108 : vector<8x128xf32> to vector<8x128xbf16>
    %123 = arith.truncf %68 : vector<128x128xf32> to vector<128x128xbf16>
    %cst_60 = arith.constant dense<0.000000e+00> : vector<8x128xf32>
    %124 = tpu.matmul %122, %123, %cst_60 {dimension_numbers = #tpu.dot_dimension_numbers<[1], [0], [0], [1], [0, 0, 1, 1], [], []>} : vector<8x128xbf16>, vector<128x128xbf16>, vector<8x128xf32> -> vector<8x128xf32>
    %125 = arith.addf %121, %124 : vector<8x128xf32>
    %c0_61 = arith.constant 0 : index
    %c0_62 = arith.constant 0 : index
    %c0_63 = arith.constant 0 : index
    %126 = vector.load %arg20[%c0_61, %c0_62, %c0_63] : memref<1x8x128xf32, #tpu.memory_space<vmem>>, vector<1x8x128xf32>
    %127 = vector.shape_cast %126 : vector<1x8x128xf32> to vector<8x128xf32>
    %128 = vector.shape_cast %125 : vector<8x128xf32> to vector<1x8x128xf32>
    tpu.vector_store %arg20[%c0_61, %c0_62, %c0_63], %128 {strides = array<i32>} : memref<1x8x128xf32, #tpu.memory_space<vmem>>, vector<1x8x128xf32>,
    %c0_64 = arith.constant 0 : index
    %c0_65 = arith.constant 0 : index
    %c0_66 = arith.constant 0 : index
    %129 = vector.load %arg18[%c0_64, %c0_65, %c0_66] : memref<1x8x1xf32, #tpu.memory_space<vmem>>, vector<1x8x1xf32>
    %130 = vector.shape_cast %129 : vector<1x8x1xf32> to vector<8x1xf32>
    %131 = vector.shape_cast %103 : vector<8x1xf32> to vector<1x8x1xf32>
    tpu.vector_store %arg18[%c0_64, %c0_65, %c0_66], %131 {strides = array<i32>} : memref<1x8x1xf32, #tpu.memory_space<vmem>>, vector<1x8x1xf32>,
    return
  }
  func.func @transform_0(%arg0: i32, %arg1: i32) -> (i32, i32) {
    %c2_i32 = arith.constant 2 : i32
    %0 = arith.muli %arg0, %c2_i32 : i32
    %1 = arith.addi %0, %arg1 : i32
    %c0_i32 = arith.constant 0 : i32
    %c0_i32_0 = arith.constant 0 : i32
    return %1, %c0_i32 : i32, i32
  }
  func.func @transform_1(%arg0: i32, %arg1: i32) -> (i32, i32) {
    %c2_i32 = arith.constant 2 : i32
    %0 = arith.muli %arg0, %c2_i32 : i32
    %1 = arith.addi %0, %arg1 : i32
    %c0_i32 = arith.constant 0 : i32
    %c0_i32_0 = arith.constant 0 : i32
    return %1, %c0_i32 : i32, i32
  }
  func.func @transform_2(%arg0: i32, %arg1: i32) -> (i32, i32) {
    %c0_i32 = arith.constant 0 : i32
    %c0_i32_0 = arith.constant 0 : i32
    %c0_i32_1 = arith.constant 0 : i32
    return %c0_i32, %c0_i32_0 : i32, i32
  }
  func.func @transform_3(%arg0: i32, %arg1: i32) -> (i32, i32) {
    %c0_i32 = arith.constant 0 : i32
    %c0_i32_0 = arith.constant 0 : i32
    %c0_i32_1 = arith.constant 0 : i32
    return %c0_i32, %c0_i32_0 : i32, i32
  }
  func.func @transform_4(%arg0: i32, %arg1: i32) -> (i32, i32) {
    %c0_i32 = arith.constant 0 : i32
    %c0_i32_0 = arith.constant 0 : i32
    %c0_i32_1 = arith.constant 0 : i32
    return %c0_i32, %c0_i32_0 : i32, i32
  }
  func.func @transform_5(%arg0: i32, %arg1: i32) -> (i32, i32) {
    %c0_i32 = arith.constant 0 : i32
    %c0_i32_0 = arith.constant 0 : i32
    %c0_i32_1 = arith.constant 0 : i32
    return %c0_i32, %c0_i32_0 : i32, i32
  }
  func.func @transform_6(%arg0: i32, %arg1: i32) -> (i32, i32) {
    %c0_i32 = arith.constant 0 : i32
    %c0_i32_0 = arith.constant 0 : i32
    %c0_i32_1 = arith.constant 0 : i32
    return %c0_i32, %c0_i32_0 : i32, i32
  }
  func.func @transform_7(%arg0: i32, %arg1: i32) -> (i32, i32) {
    %c0_i32 = arith.constant 0 : i32
    %c0_i32_0 = arith.constant 0 : i32
    %c0_i32_1 = arith.constant 0 : i32
    return %c0_i32, %c0_i32_0 : i32, i32
  }
  func.func @transform_8(%arg0: i32, %arg1: i32) -> (i32, i32) {
    %c0_i32 = arith.constant 0 : i32
    %c0_i32_0 = arith.constant 0 : i32
    %c0_i32_1 = arith.constant 0 : i32
    return %c0_i32, %c0_i32_0 : i32, i32
  }
  func.func @transform_9(%arg0: i32, %arg1: i32) -> (i32, i32) {
    %c0_i32 = arith.constant 0 : i32
    %c0_i32_0 = arith.constant 0 : i32
    %c0_i32_1 = arith.constant 0 : i32
    return %c0_i32, %c0_i32_0 : i32, i32
  }
  func.func @transform_10(%arg0: i32, %arg1: i32) -> (i32, i32) {
    %c0_i32 = arith.constant 0 : i32
    %c0_i32_0 = arith.constant 0 : i32
    %c0_i32_1 = arith.constant 0 : i32
    return %c0_i32, %c0_i32_0 : i32, i32
  }
  func.func @transform_11(%arg0: i32, %arg1: i32) -> (i32, i32) {
    %c0_i32 = arith.constant 0 : i32
    %c0_i32_0 = arith.constant 0 : i32
    %c0_i32_1 = arith.constant 0 : i32
    return %c0_i32, %c0_i32_0 : i32, i32
  }
  func.func @transform_12(%arg0: i32, %arg1: i32) -> (i32, i32) {
    %c0_i32 = arith.constant 0 : i32
    %c0_i32_0 = arith.constant 0 : i32
    %c0_i32_1 = arith.constant 0 : i32
    return %c0_i32, %c0_i32_0 : i32, i32
  }
  func.func @transform_13(%arg0: i32, %arg1: i32) -> (i32, i32) {
    %c0_i32 = arith.constant 0 : i32
    %c0_i32_0 = arith.constant 0 : i32
    %c0_i32_1 = arith.constant 0 : i32
    return %c0_i32, %c0_i32_0 : i32, i32
  }
  func.func @transform_14(%arg0: i32, %arg1: i32) -> (i32, i32) {
    %c0_i32 = arith.constant 0 : i32
    %c0_i32_0 = arith.constant 0 : i32
    %c0_i32_1 = arith.constant 0 : i32
    return %c0_i32, %c0_i32_0 : i32, i32
  }
  func.func @transform_15(%arg0: i32, %arg1: i32) -> (i32, i32) {
    %c2_i32 = arith.constant 2 : i32
    %0 = arith.muli %arg0, %c2_i32 : i32
    %1 = arith.addi %0, %arg1 : i32
    %c0_i32 = arith.constant 0 : i32
    %c0_i32_0 = arith.constant 0 : i32
    return %c0_i32, %1 : i32, i32
  }
  func.func @transform_16(%arg0: i32, %arg1: i32) -> (i32, i32, i32) {
    %c0_i32 = arith.constant 0 : i32
    %c0_i32_0 = arith.constant 0 : i32
    %c0_i32_1 = arith.constant 0 : i32
    return %arg0, %c0_i32, %c0_i32_0 : i32, i32, i32
  }
  func.func @transform_17(%arg0: i32, %arg1: i32) -> (i32, i32, i32) {
    %c0_i32 = arith.constant 0 : i32
    %c0_i32_0 = arith.constant 0 : i32
    %c0_i32_1 = arith.constant 0 : i32
    return %arg0, %c0_i32, %c0_i32_0 : i32, i32, i32
  }
  func.func @transform_18(%arg0: i32, %arg1: i32) -> (i32, i32, i32) {
    %c0_i32 = arith.constant 0 : i32
    %c0_i32_0 = arith.constant 0 : i32
    %c0_i32_1 = arith.constant 0 : i32
    return %arg0, %c0_i32, %c0_i32_0 : i32, i32, i32
  }
}

</mosaic_0001>

<llo_original>
// kernel: tpu_custom_call.1
$region0: #{tpu_custom_call.1}
  #allocation0 [shape = 'u32[]', space=smem, size = 0x4, offset = 0x4, fixed_abs, tag = 'smem constant byte address 0x4 - core index']
  #allocation1 [shape = 'u32[144,128]{1,0:T(1,128)}', space=vmem, size = 0x12000, scoped, tag = 'internal scratch']
  %s0 = inlined_call_operand.vmem [shape: f32[200,96], index: 0, kind: input, shape index: {}]
  %s1 = inlined_call_operand.vmem [shape: f32[200,160], index: 1, kind: input, shape index: {}]
  %s2 = inlined_call_operand.vmem [shape: bf16[96,128], index: 2, kind: input, shape index: {}]
  %s3 = inlined_call_operand.vmem [shape: f32[1,128], index: 3, kind: input, shape index: {}]
  %s4 = inlined_call_operand.vmem [shape: f32[1,128], index: 4, kind: input, shape index: {}]
  %s5 = inlined_call_operand.vmem [shape: bf16[160,128], index: 5, kind: input, shape index: {}]
  %s6 = inlined_call_operand.vmem [shape: f32[1,128], index: 6, kind: input, shape index: {}]
  %s7 = inlined_call_operand.vmem [shape: f32[1,128], index: 7, kind: input, shape index: {}]
  %s8 = inlined_call_operand.vmem [shape: f32[1,2], index: 8, kind: input, shape index: {}]
  %s9 = inlined_call_operand.vmem [shape: bf16[128,128], index: 9, kind: input, shape index: {}]
  %s10 = inlined_call_operand.vmem [shape: f32[1,128], index: 10, kind: input, shape index: {}]
  %s11 = inlined_call_operand.vmem [shape: bf16[128,256], index: 11, kind: input, shape index: {}]
  %s12 = inlined_call_operand.vmem [shape: f32[1,256], index: 12, kind: input, shape index: {}]
  %s13 = inlined_call_operand.vmem [shape: bf16[128,8], index: 13, kind: input, shape index: {}]
  %s14 = inlined_call_operand.vmem [shape: f32[8,1], index: 14, kind: input, shape index: {}]
  %s15 = inlined_call_operand.hbm [shape: f32[8,256], index: 15, kind: output, shape index: {0}]
  %s16 = inlined_call_operand.vmem [shape: f32[1,8,1], index: 16, kind: output, shape index: {1}]
  %s17 = inlined_call_operand.vmem [shape: f32[1,8,1], index: 17, kind: output, shape index: {2}]
  %s18 = inlined_call_operand.hbm [shape: f32[1,8,128], index: 18, kind: output, shape index: {3}]
  %19 = xla_tuple %s15, %s16, %s17, %s18
  %s20 = sld [smem:[#allocation0]]
  $region121: #{tpu_custom_call.1} parent=0
    _
  %s22 = ssub.s32 1, %s20
  %s23 = scalar_select 0, %s22, %s20
  $region1: #{tpu_custom_call.1} parent=0
    #allocation2 [shape = 'u8[8192]{0}', space=vmem, size = 0x2000, scoped, tag = 'output window, operand 0']
    #allocation3 [shape = 's32[2]{0}', space=sflag, size = 0x8, scoped, tag = 'scoped memory for tpu_custom_call.1']
    #allocation4 [shape = 'u8[4096]{0}', space=vmem, size = 0x1000, scoped, tag = 'output window, operand 3, single buffered']
    #allocation5 [shape = 's32[1]{0}', space=sflag, size = 0x4, scoped, tag = 'scoped memory for tpu_custom_call.1']
    %24 = vsyncpa [#allocation3], 0
    %s25 = scalar_lea.sflag [#allocation3], 1
    %26 = vsyncpa %s25, 0
    %27 = vsyncpa [#allocation5], 0
    loop: start=0, step=1, limit=4
    $region2: #{tpu_custom_call.1} parent=1 // loop_pre_header
      _
    $region3: #{tpu_custom_call.1} parent=1 // loop_header
      %s29 = sphi 0, %s33
      %p30 = scmp.ge.s32.totalorder %s29, 4
      %s36 = sphi 0, %s48
      %s37 = sphi 0, %s44
      %s38 = sphi 0, %s36
      %s39 = sphi 0, %s37
      %s40 = sphi 0, %s38
      %s41 = sphi 0, %s39
      %s55 = sphi 0, %s57
      %s58 = sphi 0, %s55
      %s59 = sphi 0, %s58
      %s75 = sphi 0, %s59
      %s85 = sphi 0, %s87
      %s88 = sphi 0, %s85
      %s89 = sphi 0, %s88
      %s105 = sphi 0, %s89
      %s109 = sphi 0, %s109
      %s111 = sphi 0, %s109
      %s112 = sphi 0, %s111
      %s126 = sphi 0, %s112
      %s130 = sphi 0, %s130
      %s132 = sphi 0, %s130
      %s133 = sphi 0, %s132
      %s147 = sphi 0, %s133
      %s151 = sphi 0, %s151
      %s153 = sphi 0, %s151
      %s154 = sphi 0, %s153
      %s168 = sphi 0, %s154
      %s172 = sphi 0, %s172
      %s174 = sphi 0, %s172
      %s175 = sphi 0, %s174
      %s189 = sphi 0, %s175
      %s193 = sphi 0, %s193
      %s195 = sphi 0, %s193
      %s196 = sphi 0, %s195
      %s210 = sphi 0, %s196
      %s214 = sphi 0, %s214
      %s216 = sphi 0, %s214
      %s217 = sphi 0, %s216
      %s231 = sphi 0, %s217
      %s235 = sphi 0, %s235
      %s237 = sphi 0, %s235
      %s238 = sphi 0, %s237
      %s252 = sphi 0, %s238
      %s256 = sphi 0, %s256
      %s258 = sphi 0, %s256
      %s259 = sphi 0, %s258
      %s273 = sphi 0, %s259
      %s277 = sphi 0, %s277
      %s279 = sphi 0, %s277
      %s280 = sphi 0, %s279
      %s294 = sphi 0, %s280
      %s298 = sphi 0, %s298
      %s300 = sphi 0, %s298
      %s301 = sphi 0, %s300
      %s315 = sphi 0, %s301
      %s319 = sphi 0, %s319
      %s321 = sphi 0, %s319
      %s322 = sphi 0, %s321
      %s336 = sphi 0, %s322
      %s340 = sphi 0, %s340
      %s342 = sphi 0, %s340
      %s343 = sphi 0, %s342
      %s357 = sphi 0, %s343
      %s361 = sphi 0, %s361
      %s363 = sphi 0, %s361
      %s364 = sphi 0, %s363
      %s378 = sphi 0, %s364
      %s388 = sphi 0, %s390
      %s391 = sphi 0, %s388
      %s392 = sphi 0, %s391
      %s408 = sphi 0, %s392
      %s414 = sphi 0, %s416
      %s417 = sphi 0, %s414
      %s418 = sphi 0, %s417
      %s434 = sphi 0, %s418
      %s440 = sphi 0, %s442
      %s443 = sphi 0, %s440
      %s444 = sphi 0, %s443
      %s460 = sphi 0, %s444
      %s466 = sphi 0, %s468
      %s469 = sphi 0, %s466
      %s470 = sphi 0, %s469
      %s486 = sphi 0, %s470
    $region4: #{tpu_custom_call.1} parent=1 // loop_header_branch
      %32 = sbr.rel (%p30) target = $region8
    $region5: #{tpu_custom_call.1} parent=1 // loop_body
      %s34 = ssub.s32 %s29, 1
      %s35 = ssub.s32 %s29, 2
      %s42 = sadd.s32 1, %s37
      %p43 = scmp.ge.s32.totalorder %s42, 2
      %s44 = scalar_select %p43, 0, %s42
      %s45 = sadd.s32 1, %s36
      %s46 = scalar_select %p43, %s45, %s36
      %p47 = scmp.ge.s32.totalorder %s46, 1
      %s48 = scalar_select %p47, 0, %s46
      %s49 = smul.u32 %s36, 2
      %s50 = sadd.s32 %s49, %s37
      %s51 = smul.u32 %s48, 2
      %s52 = sadd.s32 %s51, %s44
      %s53 = ssub.s32 %s50, %s52
      %p54 = scmp.eq.s32.totalorder %s53, 0
      %s56 = sadd.s32 %s55, 1
      %s57 = scalar_select %p54, %s55, %s56
      %p60 = pneg %p54
      %p61 = scmp.eq.s32.totalorder %s29, 1
      %p62 = por %p60, %p61
      %p63 = scmp.ne.s32.totalorder %s55, %s58
      %p64 = scmp.eq.s32.totalorder %s29, 0
      %p65 = por %p63, %p64
      %p66 = scmp.ne.s32.totalorder %s55, %s58
      %p67 = scmp.eq.s32.totalorder %s34, 1
      %p68 = por %p66, %p67
      %p69 = scmp.ne.s32.totalorder %s58, %s59
      %p70 = scmp.eq.s32.totalorder %s34, 0
      %p71 = por %p69, %p70
      %p72 = scmp.ne.s32.totalorder %s58, %s59
      %p73 = scmp.eq.s32.totalorder %s35, 1
      %p74 = por %p72, %p73
      %p76 = scmp.ne.s32.totalorder %s59, %s75
      %p77 = scmp.eq.s32.totalorder %s35, 0
      %p78 = por %p76, %p77
      %s79 = smul.u32 %s36, 2
      %s80 = sadd.s32 %s79, %s37
      %s81 = smul.u32 %s48, 2
      %s82 = sadd.s32 %s81, %s44
      %s83 = ssub.s32 %s80, %s82
      %p84 = scmp.eq.s32.totalorder %s83, 0
      %s86 = sadd.s32 %s85, 1
      %s87 = scalar_select %p84, %s85, %s86
      %p90 = pneg %p84
      %p91 = scmp.eq.s32.totalorder %s29, 1
      %p92 = por %p90, %p91
      %p93 = scmp.ne.s32.totalorder %s85, %s88
      %p94 = scmp.eq.s32.totalorder %s29, 0
      %p95 = por %p93, %p94
      %p96 = scmp.ne.s32.totalorder %s85, %s88
      %p97 = scmp.eq.s32.totalorder %s34, 1
      %p98 = por %p96, %p97
      %p99 = scmp.ne.s32.totalorder %s88, %s89
      %p100 = scmp.eq.s32.totalorder %s34, 0
      %p101 = por %p99, %p100
      %p102 = scmp.ne.s32.totalorder %s88, %s89
      %p103 = scmp.eq.s32.totalorder %s35, 1
      %p104 = por %p102, %p103
      %p106 = scmp.ne.s32.totalorder %s89, %s105
      %p107 = scmp.eq.s32.totalorder %s35, 0
      %p108 = por %p106, %p107
      %s110 = sadd.s32 %s109, 1
      %p113 = scmp.eq.s32.totalorder %s29, 1
      %p114 = scmp.ne.s32.totalorder %s109, %s111
      %p115 = scmp.eq.s32.totalorder %s29, 0
      %p116 = por %p114, %p115
      %p117 = scmp.ne.s32.totalorder %s109, %s111
      %p118 = scmp.eq.s32.totalorder %s34, 1
      %p119 = por %p117, %p118
      %p120 = scmp.ne.s32.totalorder %s111, %s112
      %p121 = scmp.eq.s32.totalorder %s34, 0
      %p122 = por %p120, %p121
      %p123 = scmp.ne.s32.totalorder %s111, %s112
      %p124 = scmp.eq.s32.totalorder %s35, 1
      %p125 = por %p123, %p124
      %p127 = scmp.ne.s32.totalorder %s112, %s126
      %p128 = scmp.eq.s32.totalorder %s35, 0
      %p129 = por %p127, %p128
      %s131 = sadd.s32 %s130, 1
      %p134 = scmp.eq.s32.totalorder %s29, 1
      %p135 = scmp.ne.s32.totalorder %s130, %s132
      %p136 = scmp.eq.s32.totalorder %s29, 0
      %p137 = por %p135, %p136
      %p138 = scmp.ne.s32.totalorder %s130, %s132
      %p139 = scmp.eq.s32.totalorder %s34, 1
      %p140 = por %p138, %p139
      %p141 = scmp.ne.s32.totalorder %s132, %s133
      %p142 = scmp.eq.s32.totalorder %s34, 0
      %p143 = por %p141, %p142
      %p144 = scmp.ne.s32.totalorder %s132, %s133
      %p145 = scmp.eq.s32.totalorder %s35, 1
      %p146 = por %p144, %p145
      %p148 = scmp.ne.s32.totalorder %s133, %s147
      %p149 = scmp.eq.s32.totalorder %s35, 0
      %p150 = por %p148, %p149
      %s152 = sadd.s32 %s151, 1
      %p155 = scmp.eq.s32.totalorder %s29, 1
      %p156 = scmp.ne.s32.totalorder %s151, %s153
      %p157 = scmp.eq.s32.totalorder %s29, 0
      %p158 = por %p156, %p157
      %p159 = scmp.ne.s32.totalorder %s151, %s153
      %p160 = scmp.eq.s32.totalorder %s34, 1
      %p161 = por %p159, %p160
      %p162 = scmp.ne.s32.totalorder %s153, %s154
      %p163 = scmp.eq.s32.totalorder %s34, 0
      %p164 = por %p162, %p163
      %p165 = scmp.ne.s32.totalorder %s153, %s154
      %p166 = scmp.eq.s32.totalorder %s35, 1
      %p167 = por %p165, %p166
      %p169 = scmp.ne.s32.totalorder %s154, %s168
      %p170 = scmp.eq.s32.totalorder %s35, 0
      %p171 = por %p169, %p170
      %s173 = sadd.s32 %s172, 1
      %p176 = scmp.eq.s32.totalorder %s29, 1
      %p177 = scmp.ne.s32.totalorder %s172, %s174
      %p178 = scmp.eq.s32.totalorder %s29, 0
      %p179 = por %p177, %p178
      %p180 = scmp.ne.s32.totalorder %s172, %s174
      %p181 = scmp.eq.s32.totalorder %s34, 1
      %p182 = por %p180, %p181
      %p183 = scmp.ne.s32.totalorder %s174, %s175
      %p184 = scmp.eq.s32.totalorder %s34, 0
      %p185 = por %p183, %p184
      %p186 = scmp.ne.s32.totalorder %s174, %s175
      %p187 = scmp.eq.s32.totalorder %s35, 1
      %p188 = por %p186, %p187
      %p190 = scmp.ne.s32.totalorder %s175, %s189
      %p191 = scmp.eq.s32.totalorder %s35, 0
      %p192 = por %p190, %p191
      %s194 = sadd.s32 %s193, 1
      %p197 = scmp.eq.s32.totalorder %s29, 1
      %p198 = scmp.ne.s32.totalorder %s193, %s195
      %p199 = scmp.eq.s32.totalorder %s29, 0
      %p200 = por %p198, %p199
      %p201 = scmp.ne.s32.totalorder %s193, %s195
      %p202 = scmp.eq.s32.totalorder %s34, 1
      %p203 = por %p201, %p202
      %p204 = scmp.ne.s32.totalorder %s195, %s196
      %p205 = scmp.eq.s32.totalorder %s34, 0
      %p206 = por %p204, %p205
      %p207 = scmp.ne.s32.totalorder %s195, %s196
      %p208 = scmp.eq.s32.totalorder %s35, 1
      %p209 = por %p207, %p208
      %p211 = scmp.ne.s32.totalorder %s196, %s210
      %p212 = scmp.eq.s32.totalorder %s35, 0
      %p213 = por %p211, %p212
      %s215 = sadd.s32 %s214, 1
      %p218 = scmp.eq.s32.totalorder %s29, 1
      %p219 = scmp.ne.s32.totalorder %s214, %s216
      %p220 = scmp.eq.s32.totalorder %s29, 0
      %p221 = por %p219, %p220
      %p222 = scmp.ne.s32.totalorder %s214, %s216
      %p223 = scmp.eq.s32.totalorder %s34, 1
      %p224 = por %p222, %p223
      %p225 = scmp.ne.s32.totalorder %s216, %s217
      %p226 = scmp.eq.s32.totalorder %s34, 0
      %p227 = por %p225, %p226
      %p228 = scmp.ne.s32.totalorder %s216, %s217
      %p229 = scmp.eq.s32.totalorder %s35, 1
      %p230 = por %p228, %p229
      %p232 = scmp.ne.s32.totalorder %s217, %s231
      %p233 = scmp.eq.s32.totalorder %s35, 0
      %p234 = por %p232, %p233
      %s236 = sadd.s32 %s235, 1
      %p239 = scmp.eq.s32.totalorder %s29, 1
      %p240 = scmp.ne.s32.totalorder %s235, %s237
      %p241 = scmp.eq.s32.totalorder %s29, 0
      %p242 = por %p240, %p241
      %p243 = scmp.ne.s32.totalorder %s235, %s237
      %p244 = scmp.eq.s32.totalorder %s34, 1
      %p245 = por %p243, %p244
      %p246 = scmp.ne.s32.totalorder %s237, %s238
      %p247 = scmp.eq.s32.totalorder %s34, 0
      %p248 = por %p246, %p247
      %p249 = scmp.ne.s32.totalorder %s237, %s238
      %p250 = scmp.eq.s32.totalorder %s35, 1
      %p251 = por %p249, %p250
      %p253 = scmp.ne.s32.totalorder %s238, %s252
      %p254 = scmp.eq.s32.totalorder %s35, 0
      %p255 = por %p253, %p254
      %s257 = sadd.s32 %s256, 1
      %p260 = scmp.eq.s32.totalorder %s29, 1
      %p261 = scmp.ne.s32.totalorder %s256, %s258
      %p262 = scmp.eq.s32.totalorder %s29, 0
      %p263 = por %p261, %p262
      %p264 = scmp.ne.s32.totalorder %s256, %s258
      %p265 = scmp.eq.s32.totalorder %s34, 1
      %p266 = por %p264, %p265
      %p267 = scmp.ne.s32.totalorder %s258, %s259
      %p268 = scmp.eq.s32.totalorder %s34, 0
      %p269 = por %p267, %p268
      %p270 = scmp.ne.s32.totalorder %s258, %s259
      %p271 = scmp.eq.s32.totalorder %s35, 1
      %p272 = por %p270, %p271
      %p274 = scmp.ne.s32.totalorder %s259, %s273
      %p275 = scmp.eq.s32.totalorder %s35, 0
      %p276 = por %p274, %p275
      %s278 = sadd.s32 %s277, 1
      %p281 = scmp.eq.s32.totalorder %s29, 1
      %p282 = scmp.ne.s32.totalorder %s277, %s279
      %p283 = scmp.eq.s32.totalorder %s29, 0
      %p284 = por %p282, %p283
      %p285 = scmp.ne.s32.totalorder %s277, %s279
      %p286 = scmp.eq.s32.totalorder %s34, 1
      %p287 = por %p285, %p286
      %p288 = scmp.ne.s32.totalorder %s279, %s280
      %p289 = scmp.eq.s32.totalorder %s34, 0
      %p290 = por %p288, %p289
      %p291 = scmp.ne.s32.totalorder %s279, %s280
      %p292 = scmp.eq.s32.totalorder %s35, 1
      %p293 = por %p291, %p292
      %p295 = scmp.ne.s32.totalorder %s280, %s294
      %p296 = scmp.eq.s32.totalorder %s35, 0
      %p297 = por %p295, %p296
      %s299 = sadd.s32 %s298, 1
      %p302 = scmp.eq.s32.totalorder %s29, 1
      %p303 = scmp.ne.s32.totalorder %s298, %s300
      %p304 = scmp.eq.s32.totalorder %s29, 0
      %p305 = por %p303, %p304
      %p306 = scmp.ne.s32.totalorder %s298, %s300
      %p307 = scmp.eq.s32.totalorder %s34, 1
      %p308 = por %p306, %p307
      %p309 = scmp.ne.s32.totalorder %s300, %s301
      %p310 = scmp.eq.s32.totalorder %s34, 0
      %p311 = por %p309, %p310
      %p312 = scmp.ne.s32.totalorder %s300, %s301
      %p313 = scmp.eq.s32.totalorder %s35, 1
      %p314 = por %p312, %p313
      %p316 = scmp.ne.s32.totalorder %s301, %s315
      %p317 = scmp.eq.s32.totalorder %s35, 0
      %p318 = por %p316, %p317
      %s320 = sadd.s32 %s319, 1
      %p323 = scmp.eq.s32.totalorder %s29, 1
      %p324 = scmp.ne.s32.totalorder %s319, %s321
      %p325 = scmp.eq.s32.totalorder %s29, 0
      %p326 = por %p324, %p325
      %p327 = scmp.ne.s32.totalorder %s319, %s321
      %p328 = scmp.eq.s32.totalorder %s34, 1
      %p329 = por %p327, %p328
      %p330 = scmp.ne.s32.totalorder %s321, %s322
      %p331 = scmp.eq.s32.totalorder %s34, 0
      %p332 = por %p330, %p331
      %p333 = scmp.ne.s32.totalorder %s321, %s322
      %p334 = scmp.eq.s32.totalorder %s35, 1
      %p335 = por %p333, %p334
      %p337 = scmp.ne.s32.totalorder %s322, %s336
      %p338 = scmp.eq.s32.totalorder %s35, 0
      %p339 = por %p337, %p338
      %s341 = sadd.s32 %s340, 1
      %p344 = scmp.eq.s32.totalorder %s29, 1
      %p345 = scmp.ne.s32.totalorder %s340, %s342
      %p346 = scmp.eq.s32.totalorder %s29, 0
      %p347 = por %p345, %p346
      %p348 = scmp.ne.s32.totalorder %s340, %s342
      %p349 = scmp.eq.s32.totalorder %s34, 1
      %p350 = por %p348, %p349
      %p351 = scmp.ne.s32.totalorder %s342, %s343
      %p352 = scmp.eq.s32.totalorder %s34, 0
      %p353 = por %p351, %p352
      %p354 = scmp.ne.s32.totalorder %s342, %s343
      %p355 = scmp.eq.s32.totalorder %s35, 1
      %p356 = por %p354, %p355
      %p358 = scmp.ne.s32.totalorder %s343, %s357
      %p359 = scmp.eq.s32.totalorder %s35, 0
      %p360 = por %p358, %p359
      %s362 = sadd.s32 %s361, 1
      %p365 = scmp.eq.s32.totalorder %s29, 1
      %p366 = scmp.ne.s32.totalorder %s361, %s363
      %p367 = scmp.eq.s32.totalorder %s29, 0
      %p368 = por %p366, %p367
      %p369 = scmp.ne.s32.totalorder %s361, %s363
      %p370 = scmp.eq.s32.totalorder %s34, 1
      %p371 = por %p369, %p370
      %p372 = scmp.ne.s32.totalorder %s363, %s364
      %p373 = scmp.eq.s32.totalorder %s34, 0
      %p374 = por %p372, %p373
      %p375 = scmp.ne.s32.totalorder %s363, %s364
      %p376 = scmp.eq.s32.totalorder %s35, 1
      %p377 = por %p375, %p376
      %p379 = scmp.ne.s32.totalorder %s364, %s378
      %p380 = scmp.eq.s32.totalorder %s35, 0
      %p381 = por %p379, %p380
      %s382 = smul.u32 %s36, 2
      %s383 = sadd.s32 %s382, %s37
      %s384 = smul.u32 %s48, 2
      %s385 = sadd.s32 %s384, %s44
      %s386 = ssub.s32 %s383, %s385
      %p387 = scmp.eq.s32.totalorder %s386, 0
      %s389 = sadd.s32 %s388, 1
      %s390 = scalar_select %p387, %s388, %s389
      %p393 = pneg %p387
      %p394 = scmp.eq.s32.totalorder %s29, 1
      %p395 = por %p393, %p394
      %p396 = scmp.ne.s32.totalorder %s388, %s391
      %p397 = scmp.eq.s32.totalorder %s29, 0
      %p398 = por %p396, %p397
      %p399 = scmp.ne.s32.totalorder %s388, %s391
      %p400 = scmp.eq.s32.totalorder %s34, 1
      %p401 = por %p399, %p400
      %p402 = scmp.ne.s32.totalorder %s391, %s392
      %p403 = scmp.eq.s32.totalorder %s34, 0
      %p404 = por %p402, %p403
      %p405 = scmp.ne.s32.totalorder %s391, %s392
      %p406 = scmp.eq.s32.totalorder %s35, 1
      %p407 = por %p405, %p406
      %p409 = scmp.ne.s32.totalorder %s392, %s408
      %p410 = scmp.eq.s32.totalorder %s35, 0
      %p411 = por %p409, %p410
      %s412 = ssub.s32 %s36, %s48
      %p413 = scmp.eq.s32.totalorder %s412, 0
      %s415 = sadd.s32 %s414, 1
      %s416 = scalar_select %p413, %s414, %s415
      %p419 = pneg %p413
      %p420 = scmp.eq.s32.totalorder %s29, 1
      %p421 = por %p419, %p420
      %p422 = scmp.ne.s32.totalorder %s414, %s417
      %p423 = scmp.eq.s32.totalorder %s29, 0
      %p424 = por %p422, %p423
      %p425 = scmp.ne.s32.totalorder %s414, %s417
      %p426 = scmp.eq.s32.totalorder %s34, 1
      %p427 = por %p425, %p426
      %p428 = scmp.ne.s32.totalorder %s417, %s418
      %p429 = scmp.eq.s32.totalorder %s34, 0
      %p430 = por %p428, %p429
      %p431 = scmp.ne.s32.totalorder %s417, %s418
      %p432 = scmp.eq.s32.totalorder %s35, 1
      %p433 = por %p431, %p432
      %p435 = scmp.ne.s32.totalorder %s418, %s434
      %p436 = scmp.eq.s32.totalorder %s35, 0
      %p437 = por %p435, %p436
      %s438 = ssub.s32 %s36, %s48
      %p439 = scmp.eq.s32.totalorder %s438, 0
      %s441 = sadd.s32 %s440, 1
      %s442 = scalar_select %p439, %s440, %s441
      %p445 = pneg %p439
      %p446 = scmp.eq.s32.totalorder %s29, 1
      %p447 = por %p445, %p446
      %p448 = scmp.ne.s32.totalorder %s440, %s443
      %p449 = scmp.eq.s32.totalorder %s29, 0
      %p450 = por %p448, %p449
      %p451 = scmp.ne.s32.totalorder %s440, %s443
      %p452 = scmp.eq.s32.totalorder %s34, 1
      %p453 = por %p451, %p452
      %p454 = scmp.ne.s32.totalorder %s443, %s444
      %p455 = scmp.eq.s32.totalorder %s34, 0
      %p456 = por %p454, %p455
      %p457 = scmp.ne.s32.totalorder %s443, %s444
      %p458 = scmp.eq.s32.totalorder %s35, 1
      %p459 = por %p457, %p458
      %p461 = scmp.ne.s32.totalorder %s444, %s460
      %p462 = scmp.eq.s32.totalorder %s35, 0
      %p463 = por %p461, %p462
      %s464 = ssub.s32 %s36, %s48
      %p465 = scmp.eq.s32.totalorder %s464, 0
      %s467 = sadd.s32 %s466, 1
      %s468 = scalar_select %p465, %s466, %s467
      %p471 = pneg %p465
      %p472 = scmp.eq.s32.totalorder %s29, 1
      %p473 = por %p471, %p472
      %p474 = scmp.ne.s32.totalorder %s466, %s469
      %p475 = scmp.eq.s32.totalorder %s29, 0
      %p476 = por %p474, %p475
      %p477 = scmp.ne.s32.totalorder %s466, %s469
      %p478 = scmp.eq.s32.totalorder %s34, 1
      %p479 = por %p477, %p478
      %p480 = scmp.ne.s32.totalorder %s469, %s470
      %p481 = scmp.eq.s32.totalorder %s34, 0
      %p482 = por %p480, %p481
      %p483 = scmp.ne.s32.totalorder %s469, %s470
      %p484 = scmp.eq.s32.totalorder %s35, 1
      %p485 = por %p483, %p484
      %p487 = scmp.ne.s32.totalorder %s470, %s486
      %p488 = scmp.eq.s32.totalorder %s35, 0
      %p489 = por %p487, %p488
      %p490 = scmp.le.s32.totalorder 1, %s29
      %p491 = scmp.lt.s32.totalorder %s29, 3
      %p492 = pnand %p490, %p491
      %p493 = pneg %p492
      // Predicated region
      $region9: #{tpu_custom_call.1} parent=5 // pred_check
        _
      $region10: #{tpu_custom_call.1} parent=5 // pred_check_branch
        %495 = sbr.rel (%p492) target = $region12
      $region11: #{tpu_custom_call.1} parent=5 // pred_region
        %s496 = ssub.s32 %s29, 1
        // Predicated region
        $region13: #{tpu_custom_call.1} parent=11 // pred_check
          %p497 = pneg %p122
        $region14: #{tpu_custom_call.1} parent=11 // pred_check_branch
          %499 = sbr.rel (%p497) target = $region16
        $region15: #{tpu_custom_call.1} parent=11 // pred_region
          _
        $region16: #{tpu_custom_call.1} parent=11 // pred_fallthru
          _
        // Predicated region
        $region17: #{tpu_custom_call.1} parent=11 // pred_check
          %p500 = pneg %p143
        $region18: #{tpu_custom_call.1} parent=11 // pred_check_branch
          %502 = sbr.rel (%p500) target = $region20
        $region19: #{tpu_custom_call.1} parent=11 // pred_region
          _
        $region20: #{tpu_custom_call.1} parent=11 // pred_fallthru
          _
        // Predicated region
        $region21: #{tpu_custom_call.1} parent=11 // pred_check
          %p503 = pneg %p164
        $region22: #{tpu_custom_call.1} parent=11 // pred_check_branch
          %505 = sbr.rel (%p503) target = $region24
        $region23: #{tpu_custom_call.1} parent=11 // pred_region
          _
        $region24: #{tpu_custom_call.1} parent=11 // pred_fallthru
          _
        // Predicated region
        $region25: #{tpu_custom_call.1} parent=11 // pred_check
          %p506 = pneg %p185
        $region26: #{tpu_custom_call.1} parent=11 // pred_check_branch
          %508 = sbr.rel (%p506) target = $region28
        $region27: #{tpu_custom_call.1} parent=11 // pred_region
          _
        $region28: #{tpu_custom_call.1} parent=11 // pred_fallthru
          _
        // Predicated region
        $region29: #{tpu_custom_call.1} parent=11 // pred_check
          %p509 = pneg %p206
        $region30: #{tpu_custom_call.1} parent=11 // pred_check_branch
          %511 = sbr.rel (%p509) target = $region32
        $region31: #{tpu_custom_call.1} parent=11 // pred_region
          _
        $region32: #{tpu_custom_call.1} parent=11 // pred_fallthru
          _
        // Predicated region
        $region33: #{tpu_custom_call.1} parent=11 // pred_check
          %p512 = pneg %p227
        $region34: #{tpu_custom_call.1} parent=11 // pred_check_branch
          %514 = sbr.rel (%p512) target = $region36
        $region35: #{tpu_custom_call.1} parent=11 // pred_region
          _
        $region36: #{tpu_custom_call.1} parent=11 // pred_fallthru
          _
        // Predicated region
        $region37: #{tpu_custom_call.1} parent=11 // pred_check
          %p515 = pneg %p248
        $region38: #{tpu_custom_call.1} parent=11 // pred_check_branch
          %517 = sbr.rel (%p515) target = $region40
        $region39: #{tpu_custom_call.1} parent=11 // pred_region
          _
        $region40: #{tpu_custom_call.1} parent=11 // pred_fallthru
          _
        // Predicated region
        $region41: #{tpu_custom_call.1} parent=11 // pred_check
          %p518 = pneg %p269
        $region42: #{tpu_custom_call.1} parent=11 // pred_check_branch
          %520 = sbr.rel (%p518) target = $region44
        $region43: #{tpu_custom_call.1} parent=11 // pred_region
          _
        $region44: #{tpu_custom_call.1} parent=11 // pred_fallthru
          _
        // Predicated region
        $region45: #{tpu_custom_call.1} parent=11 // pred_check
          %p521 = pneg %p290
        $region46: #{tpu_custom_call.1} parent=11 // pred_check_branch
          %523 = sbr.rel (%p521) target = $region48
        $region47: #{tpu_custom_call.1} parent=11 // pred_region
          _
        $region48: #{tpu_custom_call.1} parent=11 // pred_fallthru
          _
        // Predicated region
        $region49: #{tpu_custom_call.1} parent=11 // pred_check
          %p524 = pneg %p311
        $region50: #{tpu_custom_call.1} parent=11 // pred_check_branch
          %526 = sbr.rel (%p524) target = $region52
        $region51: #{tpu_custom_call.1} parent=11 // pred_region
          _
        $region52: #{tpu_custom_call.1} parent=11 // pred_fallthru
          _
        // Predicated region
        $region53: #{tpu_custom_call.1} parent=11 // pred_check
          %p527 = pneg %p332
        $region54: #{tpu_custom_call.1} parent=11 // pred_check_branch
          %529 = sbr.rel (%p527) target = $region56
        $region55: #{tpu_custom_call.1} parent=11 // pred_region
          _
        $region56: #{tpu_custom_call.1} parent=11 // pred_fallthru
          _
        // Predicated region
        $region57: #{tpu_custom_call.1} parent=11 // pred_check
          %p530 = pneg %p353
        $region58: #{tpu_custom_call.1} parent=11 // pred_check_branch
          %532 = sbr.rel (%p530) target = $region60
        $region59: #{tpu_custom_call.1} parent=11 // pred_region
          _
        $region60: #{tpu_custom_call.1} parent=11 // pred_fallthru
          _
        // Predicated region
        $region61: #{tpu_custom_call.1} parent=11 // pred_check
          %p533 = pneg %p374
        $region62: #{tpu_custom_call.1} parent=11 // pred_check_branch
          %535 = sbr.rel (%p533) target = $region64
        $region63: #{tpu_custom_call.1} parent=11 // pred_region
          _
        $region64: #{tpu_custom_call.1} parent=11 // pred_fallthru
          _
      $region12: #{tpu_custom_call.1} parent=5 // pred_fallthru
        _
      %p536 = scmp.lt.s32.totalorder %s29, 2
      // Predicated region
      $region65: #{tpu_custom_call.1} parent=5 // pred_check
        %p537 = pneg %p536
      $region66: #{tpu_custom_call.1} parent=5 // pred_check_branch
        %539 = sbr.rel (%p537) target = $region68
      $region67: #{tpu_custom_call.1} parent=5 // pred_region
        // Predicated region
        $region69: #{tpu_custom_call.1} parent=67 // pred_check
          %p540 = pneg %p65
        $region70: #{tpu_custom_call.1} parent=67 // pred_check_branch
          %542 = sbr.rel (%p540) target = $region72
        $region71: #{tpu_custom_call.1} parent=67 // pred_region
          %s543 = smul.u32 %s36, 2
          %s544 = sadd.s32 %s543, %s37
          %s545 = smul.u32 16, %s544
          %s546 = ssub.s32 25, %s545
          %p547 = scmp.lt.s32.totalorder %s546, 16
          %s548 = scalar_select %p547, %s546, 16
          %s549 = smul.u32 128, %s548
          %p550 = scmp.lt.s32.totalorder %s545, 24
          %s551 = scalar_select %p550, %s545, 24
          %s552 = smul.addr %s551, 8
          %s553 = scalar_lea.vmem %s0, %s552
          %s554 = smul.u32 %s36, 2
          %s555 = sadd.s32 %s554, %s37
          %s556 = smul.u32 16, %s555
          %s557 = ssub.s32 25, %s556
          %p558 = scmp.lt.s32.totalorder %s557, 16
          %s559 = scalar_select %p558, %s557, 16
          %s560 = smul.u32 128, %s559
        $region72: #{tpu_custom_call.1} parent=67 // pred_fallthru
          _
        // Predicated region
        $region73: #{tpu_custom_call.1} parent=67 // pred_check
          %p561 = pneg %p95
        $region74: #{tpu_custom_call.1} parent=67 // pred_check_branch
          %563 = sbr.rel (%p561) target = $region76
        $region75: #{tpu_custom_call.1} parent=67 // pred_region
          %s564 = smul.u32 %s36, 2
          %s565 = sadd.s32 %s564, %s37
          %s566 = smul.u32 16, %s565
          %s567 = ssub.s32 25, %s566
          %p568 = scmp.lt.s32.totalorder %s567, 16
          %s569 = scalar_select %p568, %s567, 16
          %s570 = smul.u32 128, %s569
          %s571 = smul.u32 %s570, 2
          %p572 = scmp.lt.s32.totalorder %s566, 24
          %s573 = scalar_select %p572, %s566, 24
          %s574 = smul.addr %s573, 2
          %s575 = smul.addr %s574, 8
          %s576 = scalar_lea.vmem %s1, %s575
          %s577 = smul.u32 %s36, 2
          %s578 = sadd.s32 %s577, %s37
          %s579 = smul.u32 16, %s578
          %s580 = ssub.s32 25, %s579
          %p581 = scmp.lt.s32.totalorder %s580, 16
          %s582 = scalar_select %p581, %s580, 16
          %s583 = smul.u32 128, %s582
          %s584 = smul.u32 %s583, 2
        $region76: #{tpu_custom_call.1} parent=67 // pred_fallthru
          _
      $region68: #{tpu_custom_call.1} parent=5 // pred_fallthru
        _
      %p585 = scmp.le.s32.totalorder 1, %s29
      %p586 = scmp.lt.s32.totalorder %s29, 3
      %p587 = pnand %p585, %p586
      %p588 = pneg %p587
      // Predicated region
      $region77: #{tpu_custom_call.1} parent=5 // pred_check
        _
      $region78: #{tpu_custom_call.1} parent=5 // pred_check_branch
        %590 = sbr.rel (%p587) target = $region80
      $region79: #{tpu_custom_call.1} parent=5 // pred_region
        %s591 = ssub.s32 %s29, 1
        %s592 = smul.u32 %s38, 2
        %s593 = sadd.s32 %s592, %s39
        %s594 = smul.u32 16, %s593
        %s595 = ssub.s32 25, %s594
        %p596 = scmp.lt.s32.totalorder %s595, 16
        %s597 = scalar_select %p596, %s595, 16
        %s598 = smul.u32 128, %s597
        %p599 = scmp.lt.s32.totalorder %s594, 24
        %s600 = scalar_select %p599, %s594, 24
        %s601 = smul.addr %s600, 8
        %s602 = scalar_lea.vmem %s0, %s601
        %p603 = pneg %p71
        %p604 = pneg %p68
        %s605 = smul.u32 %s38, 2
        %s606 = sadd.s32 %s605, %s39
        %s607 = smul.u32 16, %s606
        %s608 = ssub.s32 25, %s607
        %p609 = scmp.lt.s32.totalorder %s608, 16
        %s610 = scalar_select %p609, %s608, 16
        %s611 = smul.u32 128, %s610
        %s612 = smul.u32 %s611, 2
        %p613 = scmp.lt.s32.totalorder %s607, 24
        %s614 = scalar_select %p613, %s607, 24
        %s615 = smul.addr %s614, 2
        %s616 = smul.addr %s615, 8
        %s617 = scalar_lea.vmem %s1, %s616
        %p618 = pneg %p101
        %p619 = pneg %p98
        %p620 = pneg %p122
        %p621 = pneg %p119
        %p622 = pneg %p143
        %p623 = pneg %p140
        %p624 = pneg %p164
        %p625 = pneg %p161
        %p626 = pneg %p185
        %p627 = pneg %p182
        %p628 = pneg %p206
        %p629 = pneg %p203
        %p630 = pneg %p227
        %p631 = pneg %p224
        %p632 = pneg %p248
        %p633 = pneg %p245
        %p634 = pneg %p269
        %p635 = pneg %p266
        %p636 = pneg %p290
        %p637 = pneg %p287
        %p638 = pneg %p311
        %p639 = pneg %p308
        %p640 = pneg %p332
        %p641 = pneg %p329
        %p642 = pneg %p353
        %p643 = pneg %p350
        %p644 = pneg %p374
        %p645 = pneg %p371
        %p646 = pneg %p404
        %p647 = pneg %p401
        %s648 = sand.u32 %s391, 1
        %s649 = scalar_lea.sflag [#allocation3], %s648
        %s650 = sand.u32 %s391, 1
        %s651 = smul.addr %s650, 8
        %s652 = scalar_lea.vmem [#allocation2], %s651
        %p653 = pneg %p430
        %p654 = pneg %p427
        %p655 = scmp.lt.s32.totalorder %s38, 0
        %s656 = scalar_select %p655, %s38, 0
        %s657 = smul.addr %s656, 8
        %s658 = scalar_lea.vmem %s16, %s657
        %p659 = pneg %p456
        %p660 = pneg %p453
        %p661 = scmp.lt.s32.totalorder %s38, 0
        %s662 = scalar_select %p661, %s38, 0
        %s663 = smul.addr %s662, 8
        %s664 = scalar_lea.vmem %s17, %s663
        %p665 = pneg %p482
        %p666 = pneg %p479
        %s667 = smul.u32 %s38, 2
        %s668 = sadd.s32 %s667, %s39
        %s669 = smul.u32 16, %s668
        %s670 = ssub.s32 25, %s669
        %p671 = scmp.lt.s32.totalorder %s670, 16
        %s672 = scalar_select %p671, %s670, 16
        %s673 = smul.u32 128, %s672
        %p674 = scmp.lt.s32.totalorder %s669, 24
        %s675 = scalar_select %p674, %s669, 24
        %s676 = smul.addr %s675, 8
        %s677 = scalar_lea.vmem %s0, %s676
        %s678 = smul.u32 %s38, 2
        %s679 = sadd.s32 %s678, %s39
        %s680 = smul.u32 16, %s679
        %s681 = ssub.s32 25, %s680
        %p682 = scmp.lt.s32.totalorder %s681, 16
        %s683 = scalar_select %p682, %s681, 16
        %s684 = smul.u32 128, %s683
        %s685 = smul.u32 %s38, 2
        %s686 = sadd.s32 %s685, %s39
        %s687 = smul.u32 16, %s686
        %s688 = ssub.s32 25, %s687
        %p689 = scmp.lt.s32.totalorder %s688, 16
        %s690 = scalar_select %p689, %s688, 16
        %s691 = smul.u32 128, %s690
        %s692 = smul.u32 %s691, 2
        %p693 = scmp.lt.s32.totalorder %s687, 24
        %s694 = scalar_select %p693, %s687, 24
        %s695 = smul.addr %s694, 2
        %s696 = smul.addr %s695, 8
        %s697 = scalar_lea.vmem %s1, %s696
        %s698 = smul.u32 %s38, 2
        %s699 = sadd.s32 %s698, %s39
        %s700 = smul.u32 16, %s699
        %s701 = ssub.s32 25, %s700
        %p702 = scmp.lt.s32.totalorder %s701, 16
        %s703 = scalar_select %p702, %s701, 16
        %s704 = smul.u32 128, %s703
        %s705 = smul.u32 %s704, 2
        %s706 = smul.u32 %s38, 2
        %s707 = sadd.s32 %s706, %s39
        %p708 = scmp.lt.s32.totalorder %s38, 0
        %s709 = scalar_select %p708, %s38, 0
        %s710 = smul.addr %s709, 8
        %s711 = scalar_lea.vmem %s16, %s710
        %p712 = scmp.lt.s32.totalorder %s38, 0
        %s713 = scalar_select %p712, %s38, 0
        %s714 = smul.addr %s713, 8
        %s715 = scalar_lea.vmem %s17, %s714
        %s717 = smul.u32 %s38, 2
        %s718 = sadd.s32 %s717, %s39
        %p719 = scmp.eq.s32.totalorder %s39, 0
        // Predicated region
        $region81: #{tpu_custom_call.1} parent=79 // pred_check
          %p720 = pneg %p719
        $region82: #{tpu_custom_call.1} parent=79 // pred_check_branch
          %722 = sbr.rel (%p720) target = $region84
        $region83: #{tpu_custom_call.1} parent=79 // pred_region
          %vm723 = vcmask 7168
          %724 = vst.msk [vmem:[%s711] sm:$0xff] %vm723, -1e+30
          %725 = vst.msk [vmem:[%s715] sm:$0xff] %vm723, 0.0
          %726 = vst [vmem:[#allocation4] sm:$0xff] 0.0
        $region84: #{tpu_custom_call.1} parent=79 // pred_fallthru
          _
        %v727 = vld [vmem:[%s677] sm:$0xff]
        %v728 = vld [vmem:[%s677 + $0x8] sm:$0xff]
        %v729 = vld [vmem:[%s677 + $0x10] sm:$0xff]
        %v730 = vld [vmem:[%s677 + $0x18] sm:$0xff]
        %v731 = vld [vmem:[%s677 + $0x20] sm:$0xff]
        %v732 = vld [vmem:[%s677 + $0x28] sm:$0xff]
        %v733 = vld [vmem:[%s677 + $0x30] sm:$0xff]
        %v734 = vld [vmem:[%s677 + $0x38] sm:$0xff]
        %v735 = vld [vmem:[%s677 + $0x40] sm:$0xff]
        %v736 = vld [vmem:[%s677 + $0x48] sm:$0xff]
        %v737 = vld [vmem:[%s677 + $0x50] sm:$0xff]
        %v738 = vld [vmem:[%s677 + $0x58] sm:$0xff]
        %v739 = vld [vmem:[%s677 + $0x60] sm:$0xff]
        %v740 = vld [vmem:[%s677 + $0x68] sm:$0xff]
        %v741 = vld [vmem:[%s677 + $0x70] sm:$0xff]
        %v742 = vld [vmem:[%s677 + $0x78] sm:$0xff]
        %v743 = vpack.c.bf16 %v728, %v727
        %v744 = vpack.c.bf16 %v730, %v729
        %v745 = vpack.c.bf16 %v732, %v731
        %v746 = vpack.c.bf16 %v734, %v733
        %v747 = vpack.c.bf16 %v736, %v735
        %v748 = vpack.c.bf16 %v738, %v737
        %v749 = vpack.c.bf16 %v740, %v739
        %v750 = vpack.c.bf16 %v742, %v741
        %v751 = vld [vmem:[%s697] sm:$0xff]
        %v752 = vld [vmem:[%s697 + $0x8] sm:$0xff]
        %v753 = vld [vmem:[%s697 + $0x10] sm:$0xff]
        %v754 = vld [vmem:[%s697 + $0x18] sm:$0xff]
        %v755 = vld [vmem:[%s697 + $0x20] sm:$0xff]
        %v756 = vld [vmem:[%s697 + $0x28] sm:$0xff]
        %v757 = vld [vmem:[%s697 + $0x30] sm:$0xff]
        %v758 = vld [vmem:[%s697 + $0x38] sm:$0xff]
        %v759 = vld [vmem:[%s697 + $0x40] sm:$0xff]
        %v760 = vld [vmem:[%s697 + $0x48] sm:$0xff]
        %v761 = vld [vmem:[%s697 + $0x50] sm:$0xff]
        %v762 = vld [vmem:[%s697 + $0x58] sm:$0xff]
        %v763 = vld [vmem:[%s697 + $0x60] sm:$0xff]
        %v764 = vld [vmem:[%s697 + $0x68] sm:$0xff]
        %v765 = vld [vmem:[%s697 + $0x70] sm:$0xff]
        %v766 = vld [vmem:[%s697 + $0x78] sm:$0xff]
        %v767 = vld [vmem:[%s697 + $0x80] sm:$0xff]
        %v768 = vld [vmem:[%s697 + $0x88] sm:$0xff]
        %v769 = vld [vmem:[%s697 + $0x90] sm:$0xff]
        %v770 = vld [vmem:[%s697 + $0x98] sm:$0xff]
        %v771 = vld [vmem:[%s697 + $0xa0] sm:$0xff]
        %v772 = vld [vmem:[%s697 + $0xa8] sm:$0xff]
        %v773 = vld [vmem:[%s697 + $0xb0] sm:$0xff]
        %v774 = vld [vmem:[%s697 + $0xb8] sm:$0xff]
        %v775 = vld [vmem:[%s697 + $0xc0] sm:$0xff]
        %v776 = vld [vmem:[%s697 + $0xc8] sm:$0xff]
        %v777 = vld [vmem:[%s697 + $0xd0] sm:$0xff]
        %v778 = vld [vmem:[%s697 + $0xd8] sm:$0xff]
        %v779 = vld [vmem:[%s697 + $0xe0] sm:$0xff]
        %v780 = vld [vmem:[%s697 + $0xe8] sm:$0xff]
        %v781 = vld [vmem:[%s697 + $0xf0] sm:$0xff]
        %v782 = vld [vmem:[%s697 + $0xf8] sm:$0xff]
        %v783 = vpack.c.bf16 %v753, %v751
        %v784 = vpack.c.bf16 %v754, %v752
        %v785 = vpack.c.bf16 %v757, %v755
        %v786 = vpack.c.bf16 %v758, %v756
        %v787 = vpack.c.bf16 %v761, %v759
        %v788 = vpack.c.bf16 %v762, %v760
        %v789 = vpack.c.bf16 %v765, %v763
        %v790 = vpack.c.bf16 %v766, %v764
        %v791 = vpack.c.bf16 %v769, %v767
        %v792 = vpack.c.bf16 %v770, %v768
        %v793 = vpack.c.bf16 %v773, %v771
        %v794 = vpack.c.bf16 %v774, %v772
        %v795 = vpack.c.bf16 %v777, %v775
        %v796 = vpack.c.bf16 %v778, %v776
        %v797 = vpack.c.bf16 %v781, %v779
        %v798 = vpack.c.bf16 %v782, %v780
        %v799 = vld [vmem:[%s2] sm:$0xf]
        %v800 = vld [vmem:[%s2 + $0x4] sm:$0xf]
        %v801 = vld [vmem:[%s2 + $0x8] sm:$0xf]
        %v802 = vld [vmem:[%s2 + $0xc] sm:$0xf]
        %v803 = vld [vmem:[%s2 + $0x10] sm:$0xf]
        %v804 = vld [vmem:[%s2 + $0x14] sm:$0xf]
        %v805 = vld [vmem:[%s2 + $0x18] sm:$0xf]
        %v806 = vld [vmem:[%s2 + $0x1c] sm:$0xf]
        %v807 = vld [vmem:[%s2 + $0x20] sm:$0xf]
        %v808 = vld [vmem:[%s2 + $0x24] sm:$0xf]
        %v809 = vld [vmem:[%s2 + $0x28] sm:$0xf]
        %v810 = vld [vmem:[%s2 + $0x2c] sm:$0xf]
        %v811 = vld [vmem:[%s3] sm:$0x1]
        %v813 = vlaneseq
        %v814 = vshrl.u32 %v813, 7
        %v815 = vsub.s32 0, %v814
        %v816 = vrot.slane %v811, %v815
        %v830 = vunpack.c.l.b16 %v799
        %v831 = vunpack.c.l.b16 %v800
        %v832 = vunpack.c.l.b16 %v801
        %v833 = vunpack.c.l.b16 %v802
        %v834 = vunpack.c.l.b16 %v803
        %v835 = vunpack.c.l.b16 %v804
        %v836 = vunpack.c.l.b16 %v805
        %v837 = vunpack.c.l.b16 %v806
        %v838 = vunpack.c.l.b16 %v807
        %v839 = vunpack.c.l.b16 %v808
        %v840 = vunpack.c.l.b16 %v809
        %v841 = vunpack.c.l.b16 %v810
        %v842 = vpack.c.b16 %v831, %v830
        %v843 = vpack.c.b16 %v833, %v832
        %v844 = vpack.c.b16 %v835, %v834
        %v845 = vpack.c.b16 %v837, %v836
        %v846 = vpack.c.b16 %v839, %v838
        %v847 = vpack.c.b16 %v841, %v840
        %vm854 = vcmask 785408
        %v856 = vsel %vm854, %v743, 0
        %v859 = vsel %vm854, %v744, 0
        %v862 = vsel %vm854, %v745, 0
        %v865 = vsel %vm854, %v746, 0
        %v868 = vsel %vm854, %v747, 0
        %v871 = vsel %vm854, %v748, 0
        %v874 = vsel %vm854, %v749, 0
        %v877 = vsel %vm854, %v750, 0
        %879 = vmatprep.subr.bf16.mxu0 0
        %880 = vmatpush1.bf16.msra.mxu0 0
        %881 = vmatprep.subr.bf16.mxu0 0
        %882 = vmatpush1.bf16.msra.mxu0 0
        %883 = vmatprep.subr.bf16.mxu0 0
        %884 = vmatpush1.bf16.msra.mxu0 %v847
        %885 = vmatprep.subr.bf16.mxu0 0
        %886 = vmatpush1.bf16.msra.mxu0 %v846
        %887 = vmatprep.subr.bf16.mxu0 0
        %888 = vmatpush1.bf16.msra.mxu0 %v845
        %889 = vmatprep.subr.bf16.mxu0 0
        %890 = vmatpush1.bf16.msra.mxu0 %v844
        %891 = vmatprep.subr.bf16.mxu0 0
        %892 = vmatpush1.bf16.msra.mxu0 %v843
        %893 = vmatprep.subr.bf16.mxu0 0
        %894 = vmatpush1.bf16.msra.mxu0 %v842
        %895 = vmatprep.subr.bf16.mxu0 0
        %896 = vmatpush2.bf16.msra.mxu0 0
        %897 = vmatprep.subr.bf16.mxu0 0
        %898 = vmatpush2.bf16.msra.mxu0 0
        %899 = vmatprep.subr.bf16.mxu0 0
        %900 = vmatpush2.bf16.msra.mxu0 0
        %901 = vmatprep.subr.bf16.mxu0 0
        %902 = vmatpush2.bf16.msra.mxu0 0
        %903 = vmatprep.subr.bf16.mxu0 0
        %904 = vmatpush2.bf16.msra.mxu0 0
        %905 = vmatprep.subr.bf16.mxu0 0
        %906 = vmatpush2.bf16.msra.mxu0 0
        %907 = vmatprep.subr.bf16.mxu0 0
        %908 = vmatpush2.bf16.msra.mxu0 0
        %909 = vmatprep.subr.bf16.mxu0 0
        %910 = vmatpush2.bf16.msra.mxu0 0
        %911 = vmatprep.mubr.bf16.mxu0 0
        %912 = vmatmul.mubr.bf16.gmra.mxu0 %v856
        %v913 = vpop.f32.mrf.mxu0
        %v914 = vadd.f32 %v816, %v913
        %v915 = vpop.f32.mrf.mxu0
        %v916 = vpop.f32.mrf.mxu0
        %v917 = vadd.f32 %v816, %v916
        %v918 = vpop.f32.mrf.mxu0
        %919 = vmatprep.mubr.bf16.mxu0 0
        %920 = vmatmul.mubr.bf16.gmra.mxu0 %v859
        %v921 = vpop.f32.mrf.mxu0
        %v922 = vadd.f32 %v816, %v921
        %v923 = vpop.f32.mrf.mxu0
        %v924 = vpop.f32.mrf.mxu0
        %v925 = vadd.f32 %v816, %v924
        %v926 = vpop.f32.mrf.mxu0
        %927 = vmatprep.mubr.bf16.mxu0 0
        %928 = vmatmul.mubr.bf16.gmra.mxu0 %v862
        %v929 = vpop.f32.mrf.mxu0
        %v930 = vadd.f32 %v816, %v929
        %v931 = vpop.f32.mrf.mxu0
        %v932 = vpop.f32.mrf.mxu0
        %v933 = vadd.f32 %v816, %v932
        %v934 = vpop.f32.mrf.mxu0
        %935 = vmatprep.mubr.bf16.mxu0 0
        %936 = vmatmul.mubr.bf16.gmra.mxu0 %v865
        %v937 = vpop.f32.mrf.mxu0
        %v938 = vadd.f32 %v816, %v937
        %v939 = vpop.f32.mrf.mxu0
        %v940 = vpop.f32.mrf.mxu0
        %v941 = vadd.f32 %v816, %v940
        %v942 = vpop.f32.mrf.mxu0
        %943 = vmatprep.mubr.bf16.mxu0 0
        %944 = vmatmul.mubr.bf16.gmra.mxu0 %v868
        %v945 = vpop.f32.mrf.mxu0
        %v946 = vadd.f32 %v816, %v945
        %v947 = vpop.f32.mrf.mxu0
        %v948 = vpop.f32.mrf.mxu0
        %v949 = vadd.f32 %v816, %v948
        %v950 = vpop.f32.mrf.mxu0
        %951 = vmatprep.mubr.bf16.mxu0 0
        %952 = vmatmul.mubr.bf16.gmra.mxu0 %v871
        %v953 = vpop.f32.mrf.mxu0
        %v954 = vadd.f32 %v816, %v953
        %v955 = vpop.f32.mrf.mxu0
        %v956 = vpop.f32.mrf.mxu0
        %v957 = vadd.f32 %v816, %v956
        %v958 = vpop.f32.mrf.mxu0
        %959 = vmatprep.mubr.bf16.mxu0 0
        %960 = vmatmul.mubr.bf16.gmra.mxu0 %v874
        %v961 = vpop.f32.mrf.mxu0
        %v962 = vadd.f32 %v816, %v961
        %v963 = vpop.f32.mrf.mxu0
        %v964 = vpop.f32.mrf.mxu0
        %v965 = vadd.f32 %v816, %v964
        %v966 = vpop.f32.mrf.mxu0
        %967 = vmatprep.mubr.bf16.mxu0 0
        %968 = vmatmul.mubr.bf16.gmra.mxu0 %v877
        %v969 = vpop.f32.mrf.mxu0
        %v970 = vadd.f32 %v816, %v969
        %v971 = vpop.f32.mrf.mxu0
        %v972 = vpop.f32.mrf.mxu0
        %v973 = vadd.f32 %v816, %v972
        %v974 = vpop.f32.mrf.mxu0
        %975 = vdwg.mxu0
        %v976 = vld [vmem:[%s5] sm:$0xf]
        %v977 = vld [vmem:[%s5 + $0x4] sm:$0xf]
        %v978 = vld [vmem:[%s5 + $0x8] sm:$0xf]
        %v979 = vld [vmem:[%s5 + $0xc] sm:$0xf]
        %v980 = vld [vmem:[%s5 + $0x10] sm:$0xf]
        %v981 = vld [vmem:[%s5 + $0x14] sm:$0xf]
        %v982 = vld [vmem:[%s5 + $0x18] sm:$0xf]
        %v983 = vld [vmem:[%s5 + $0x1c] sm:$0xf]
        %v984 = vld [vmem:[%s5 + $0x20] sm:$0xf]
        %v985 = vld [vmem:[%s5 + $0x24] sm:$0xf]
        %v986 = vld [vmem:[%s5 + $0x28] sm:$0xf]
        %v987 = vld [vmem:[%s5 + $0x2c] sm:$0xf]
        %v988 = vld [vmem:[%s5 + $0x30] sm:$0xf]
        %v989 = vld [vmem:[%s5 + $0x34] sm:$0xf]
        %v990 = vld [vmem:[%s5 + $0x38] sm:$0xf]
        %v991 = vld [vmem:[%s5 + $0x3c] sm:$0xf]
        %v992 = vld [vmem:[%s5 + $0x40] sm:$0xf]
        %v993 = vld [vmem:[%s5 + $0x44] sm:$0xf]
        %v994 = vld [vmem:[%s5 + $0x48] sm:$0xf]
        %v995 = vld [vmem:[%s5 + $0x4c] sm:$0xf]
        %v996 = vld [vmem:[%s6] sm:$0x1]
        %v998 = vlaneseq
        %v999 = vshrl.u32 %v998, 7
        %v1000 = vsub.s32 0, %v999
        %v1001 = vrot.slane %v996, %v1000
        %v1023 = vunpack.c.l.b16 %v976
        %v1024 = vunpack.c.l.b16 %v977
        %v1025 = vunpack.c.l.b16 %v978
        %v1026 = vunpack.c.l.b16 %v979
        %v1027 = vunpack.c.l.b16 %v980
        %v1028 = vunpack.c.l.b16 %v981
        %v1029 = vunpack.c.l.b16 %v982
        %v1030 = vunpack.c.l.b16 %v983
        %v1031 = vunpack.c.l.b16 %v984
        %v1032 = vunpack.c.l.b16 %v985
        %v1033 = vunpack.c.l.b16 %v986
        %v1034 = vunpack.c.l.b16 %v987
        %v1035 = vunpack.c.l.b16 %v988
        %v1036 = vunpack.c.l.b16 %v989
        %v1037 = vunpack.c.l.b16 %v990
        %v1038 = vunpack.c.l.b16 %v991
        %v1039 = vunpack.c.l.b16 %v992
        %v1040 = vunpack.c.l.b16 %v993
        %v1041 = vunpack.c.l.b16 %v994
        %v1042 = vunpack.c.l.b16 %v995
        %v1043 = vpack.c.b16 %v1024, %v1023
        %v1044 = vpack.c.b16 %v1026, %v1025
        %v1045 = vpack.c.b16 %v1028, %v1027
        %v1046 = vpack.c.b16 %v1030, %v1029
        %v1047 = vpack.c.b16 %v1032, %v1031
        %v1048 = vpack.c.b16 %v1034, %v1033
        %v1049 = vpack.c.b16 %v1036, %v1035
        %v1050 = vpack.c.b16 %v1038, %v1037
        %v1051 = vpack.c.b16 %v1040, %v1039
        %v1052 = vpack.c.b16 %v1042, %v1041
        %vm1063 = vcmask 261120
        %v1065 = vsel %vm1063, %v784, 0
        %v1068 = vsel %vm1063, %v786, 0
        %v1071 = vsel %vm1063, %v788, 0
        %v1074 = vsel %vm1063, %v790, 0
        %v1077 = vsel %vm1063, %v792, 0
        %v1080 = vsel %vm1063, %v794, 0
        %v1083 = vsel %vm1063, %v796, 0
        %v1086 = vsel %vm1063, %v798, 0
        %1088 = vmatprep.subr.bf16.mxu0 0
        %1089 = vmatpush1.bf16.msra.mxu0 %v1050
        %1090 = vmatprep.subr.bf16.mxu0 0
        %1091 = vmatpush1.bf16.msra.mxu0 %v1049
        %1092 = vmatprep.subr.bf16.mxu0 0
        %1093 = vmatpush1.bf16.msra.mxu0 %v1048
        %1094 = vmatprep.subr.bf16.mxu0 0
        %1095 = vmatpush1.bf16.msra.mxu0 %v1047
        %1096 = vmatprep.subr.bf16.mxu0 0
        %1097 = vmatpush1.bf16.msra.mxu0 %v1046
        %1098 = vmatprep.subr.bf16.mxu0 0
        %1099 = vmatpush1.bf16.msra.mxu0 %v1045
        %1100 = vmatprep.subr.bf16.mxu0 0
        %1101 = vmatpush1.bf16.msra.mxu0 %v1044
        %1102 = vmatprep.subr.bf16.mxu0 0
        %1103 = vmatpush1.bf16.msra.mxu0 %v1043
        %1104 = vmatprep.subr.bf16.mxu0 0
        %1105 = vmatpush2.bf16.msra.mxu0 0
        %1106 = vmatprep.subr.bf16.mxu0 0
        %1107 = vmatpush2.bf16.msra.mxu0 0
        %1108 = vmatprep.subr.bf16.mxu0 0
        %1109 = vmatpush2.bf16.msra.mxu0 0
        %1110 = vmatprep.subr.bf16.mxu0 0
        %1111 = vmatpush2.bf16.msra.mxu0 0
        %1112 = vmatprep.subr.bf16.mxu0 0
        %1113 = vmatpush2.bf16.msra.mxu0 0
        %1114 = vmatprep.subr.bf16.mxu0 0
        %1115 = vmatpush2.bf16.msra.mxu0 0
        %1116 = vmatprep.subr.bf16.mxu0 0
        %1117 = vmatpush2.bf16.msra.mxu0 %v1052
        %1118 = vmatprep.subr.bf16.mxu0 0
        %1119 = vmatpush2.bf16.msra.mxu0 %v1051
        %1120 = vmatprep.mubr.bf16.mxu0 %v1065
        %1121 = vmatmul.mubr.bf16.gmra.mxu0 %v783
        %v1122 = vpop.f32.mrf.mxu0
        %v1123 = vadd.f32 %v1001, %v1122
        %v1124 = vpop.f32.mrf.mxu0
        %v1125 = vpop.f32.mrf.mxu0
        %v1126 = vadd.f32 %v1001, %v1125
        %v1127 = vpop.f32.mrf.mxu0
        %1128 = vmatprep.mubr.bf16.mxu0 %v1068
        %1129 = vmatmul.mubr.bf16.gmra.mxu0 %v785
        %v1130 = vpop.f32.mrf.mxu0
        %v1131 = vadd.f32 %v1001, %v1130
        %v1132 = vpop.f32.mrf.mxu0
        %v1133 = vpop.f32.mrf.mxu0
        %v1134 = vadd.f32 %v1001, %v1133
        %v1135 = vpop.f32.mrf.mxu0
        %1136 = vmatprep.mubr.bf16.mxu0 %v1071
        %1137 = vmatmul.mubr.bf16.gmra.mxu0 %v787
        %v1138 = vpop.f32.mrf.mxu0
        %v1139 = vadd.f32 %v1001, %v1138
        %v1140 = vpop.f32.mrf.mxu0
        %v1141 = vpop.f32.mrf.mxu0
        %v1142 = vadd.f32 %v1001, %v1141
        %v1143 = vpop.f32.mrf.mxu0
        %1144 = vmatprep.mubr.bf16.mxu0 %v1074
        %1145 = vmatmul.mubr.bf16.gmra.mxu0 %v789
        %v1146 = vpop.f32.mrf.mxu0
        %v1147 = vadd.f32 %v1001, %v1146
        %v1148 = vpop.f32.mrf.mxu0
        %v1149 = vpop.f32.mrf.mxu0
        %v1150 = vadd.f32 %v1001, %v1149
        %v1151 = vpop.f32.mrf.mxu0
        %1152 = vmatprep.mubr.bf16.mxu0 %v1077
        %1153 = vmatmul.mubr.bf16.gmra.mxu0 %v791
        %v1154 = vpop.f32.mrf.mxu0
        %v1155 = vadd.f32 %v1001, %v1154
        %v1156 = vpop.f32.mrf.mxu0
        %v1157 = vpop.f32.mrf.mxu0
        %v1158 = vadd.f32 %v1001, %v1157
        %v1159 = vpop.f32.mrf.mxu0
        %1160 = vmatprep.mubr.bf16.mxu0 %v1080
        %1161 = vmatmul.mubr.bf16.gmra.mxu0 %v793
        %v1162 = vpop.f32.mrf.mxu0
        %v1163 = vadd.f32 %v1001, %v1162
        %v1164 = vpop.f32.mrf.mxu0
        %v1165 = vpop.f32.mrf.mxu0
        %v1166 = vadd.f32 %v1001, %v1165
        %v1167 = vpop.f32.mrf.mxu0
        %1168 = vmatprep.mubr.bf16.mxu0 %v1083
        %1169 = vmatmul.mubr.bf16.gmra.mxu0 %v795
        %v1170 = vpop.f32.mrf.mxu0
        %v1171 = vadd.f32 %v1001, %v1170
        %v1172 = vpop.f32.mrf.mxu0
        %v1173 = vpop.f32.mrf.mxu0
        %v1174 = vadd.f32 %v1001, %v1173
        %v1175 = vpop.f32.mrf.mxu0
        %1176 = vmatprep.mubr.bf16.mxu0 %v1086
        %1177 = vmatmul.mubr.bf16.gmra.mxu0 %v797
        %v1178 = vpop.f32.mrf.mxu0
        %v1179 = vadd.f32 %v1001, %v1178
        %v1180 = vpop.f32.mrf.mxu0
        %v1181 = vpop.f32.mrf.mxu0
        %v1182 = vadd.f32 %v1001, %v1181
        %v1183 = vpop.f32.mrf.mxu0
        %1184 = vdwg.mxu0
        %v1185 = vld [vmem:[%s8] sm:$0x1]
        %v1186 = vld [vmem:[%s4] sm:$0x1]
        %v1188 = vlaneseq
        %v1189 = vshrl.u32 %v1188, 7
        %v1190 = vsub.s32 0, %v1189
        %v1191 = vrot.slane %v1186, %v1190
        %v1193 = vmul.f32 %v914, %v1191
        %v1194 = vmul.f32 %v917, %v1191
        %v1195 = vmul.f32 %v922, %v1191
        %v1196 = vmul.f32 %v925, %v1191
        %v1197 = vmul.f32 %v930, %v1191
        %v1198 = vmul.f32 %v933, %v1191
        %v1199 = vmul.f32 %v938, %v1191
        %v1200 = vmul.f32 %v941, %v1191
        %v1201 = vmul.f32 %v946, %v1191
        %v1202 = vmul.f32 %v949, %v1191
        %v1203 = vmul.f32 %v954, %v1191
        %v1204 = vmul.f32 %v957, %v1191
        %v1205 = vmul.f32 %v962, %v1191
        %v1206 = vmul.f32 %v965, %v1191
        %v1207 = vmul.f32 %v970, %v1191
        %v1208 = vmul.f32 %v973, %v1191
        %1209 = vadd.xlane.f32.xlu0 %v1193
        %v1210 = vpop.xlane.xlu0 %1209
        %1211 = vadd.xlane.f32.xlu0 %v1194
        %v1212 = vpop.xlane.xlu0 %1211
        %1213 = vadd.xlane.f32.xlu0 %v1195
        %v1214 = vpop.xlane.xlu0 %1213
        %1215 = vadd.xlane.f32.xlu0 %v1196
        %v1216 = vpop.xlane.xlu0 %1215
        %1217 = vadd.xlane.f32.xlu0 %v1197
        %v1218 = vpop.xlane.xlu0 %1217
        %1219 = vadd.xlane.f32.xlu0 %v1198
        %v1220 = vpop.xlane.xlu0 %1219
        %1221 = vadd.xlane.f32.xlu0 %v1199
        %v1222 = vpop.xlane.xlu0 %1221
        %1223 = vadd.xlane.f32.xlu0 %v1200
        %v1224 = vpop.xlane.xlu0 %1223
        %1225 = vadd.xlane.f32.xlu0 %v1201
        %v1226 = vpop.xlane.xlu0 %1225
        %1227 = vadd.xlane.f32.xlu0 %v1202
        %v1228 = vpop.xlane.xlu0 %1227
        %1229 = vadd.xlane.f32.xlu0 %v1203
        %v1230 = vpop.xlane.xlu0 %1229
        %1231 = vadd.xlane.f32.xlu0 %v1204
        %v1232 = vpop.xlane.xlu0 %1231
        %1233 = vadd.xlane.f32.xlu0 %v1205
        %v1234 = vpop.xlane.xlu0 %1233
        %1235 = vadd.xlane.f32.xlu0 %v1206
        %v1236 = vpop.xlane.xlu0 %1235
        %1237 = vadd.xlane.f32.xlu0 %v1207
        %v1238 = vpop.xlane.xlu0 %1237
        %1239 = vadd.xlane.f32.xlu0 %v1208
        %v1240 = vpop.xlane.xlu0 %1239
        %v1242 = vlaneseq
        %v1243 = vshrl.u32 %v1242, 7
        %v1244 = vsub.s32 0, %v1243
        %v1245 = vrot.slane %v1185, %v1244
        %v1247 = vadd.f32 %v1210, %v1245
        %v1248 = vadd.f32 %v1212, %v1245
        %v1249 = vadd.f32 %v1214, %v1245
        %v1250 = vadd.f32 %v1216, %v1245
        %v1251 = vadd.f32 %v1218, %v1245
        %v1252 = vadd.f32 %v1220, %v1245
        %v1253 = vadd.f32 %v1222, %v1245
        %v1254 = vadd.f32 %v1224, %v1245
        %v1255 = vadd.f32 %v1226, %v1245
        %v1256 = vadd.f32 %v1228, %v1245
        %v1257 = vadd.f32 %v1230, %v1245
        %v1258 = vadd.f32 %v1232, %v1245
        %v1259 = vadd.f32 %v1234, %v1245
        %v1260 = vadd.f32 %v1236, %v1245
        %v1261 = vadd.f32 %v1238, %v1245
        %v1262 = vadd.f32 %v1240, %v1245
        %v1263 = vxor.u32 %v1247, 2147483648
        %v1264 = vxor.u32 %v1248, 2147483648
        %v1265 = vxor.u32 %v1249, 2147483648
        %v1266 = vxor.u32 %v1250, 2147483648
        %v1267 = vxor.u32 %v1251, 2147483648
        %v1268 = vxor.u32 %v1252, 2147483648
        %v1269 = vxor.u32 %v1253, 2147483648
        %v1270 = vxor.u32 %v1254, 2147483648
        %v1271 = vxor.u32 %v1255, 2147483648
        %v1272 = vxor.u32 %v1256, 2147483648
        %v1273 = vxor.u32 %v1257, 2147483648
        %v1274 = vxor.u32 %v1258, 2147483648
        %v1275 = vxor.u32 %v1259, 2147483648
        %v1276 = vxor.u32 %v1260, 2147483648
        %v1277 = vxor.u32 %v1261, 2147483648
        %v1278 = vxor.u32 %v1262, 2147483648
        %v1279 = vmul.f32 %v1263, 1.442695
        %v1280 = vpow.pop %v1279
        %v1281 = vmul.f32 %v1264, 1.442695
        %v1282 = vpow.pop %v1281
        %v1283 = vmul.f32 %v1265, 1.442695
        %v1284 = vpow.pop %v1283
        %v1285 = vmul.f32 %v1266, 1.442695
        %v1286 = vpow.pop %v1285
        %v1287 = vmul.f32 %v1267, 1.442695
        %v1288 = vpow.pop %v1287
        %v1289 = vmul.f32 %v1268, 1.442695
        %v1290 = vpow.pop %v1289
        %v1291 = vmul.f32 %v1269, 1.442695
        %v1292 = vpow.pop %v1291
        %v1293 = vmul.f32 %v1270, 1.442695
        %v1294 = vpow.pop %v1293
        %v1295 = vmul.f32 %v1271, 1.442695
        %v1296 = vpow.pop %v1295
        %v1297 = vmul.f32 %v1272, 1.442695
        %v1298 = vpow.pop %v1297
        %v1299 = vmul.f32 %v1273, 1.442695
        %v1300 = vpow.pop %v1299
        %v1301 = vmul.f32 %v1274, 1.442695
        %v1302 = vpow.pop %v1301
        %v1303 = vmul.f32 %v1275, 1.442695
        %v1304 = vpow.pop %v1303
        %v1305 = vmul.f32 %v1276, 1.442695
        %v1306 = vpow.pop %v1305
        %v1307 = vmul.f32 %v1277, 1.442695
        %v1308 = vpow.pop %v1307
        %v1309 = vmul.f32 %v1278, 1.442695
        %v1310 = vpow.pop %v1309
        %v1311 = vadd.f32 %v1280, 1.0
        %v1312 = vadd.f32 %v1282, 1.0
        %v1313 = vadd.f32 %v1284, 1.0
        %v1314 = vadd.f32 %v1286, 1.0
        %v1315 = vadd.f32 %v1288, 1.0
        %v1316 = vadd.f32 %v1290, 1.0
        %v1317 = vadd.f32 %v1292, 1.0
        %v1318 = vadd.f32 %v1294, 1.0
        %v1319 = vadd.f32 %v1296, 1.0
        %v1320 = vadd.f32 %v1298, 1.0
        %v1321 = vadd.f32 %v1300, 1.0
        %v1322 = vadd.f32 %v1302, 1.0
        %v1323 = vadd.f32 %v1304, 1.0
        %v1324 = vadd.f32 %v1306, 1.0
        %v1325 = vadd.f32 %v1308, 1.0
        %v1326 = vadd.f32 %v1310, 1.0
        %v1327 = vrcp.pop %v1311
        %v1328 = vmul.f32 1.0, %v1327
        %v1329 = vrcp.pop %v1312
        %v1330 = vmul.f32 1.0, %v1329
        %v1331 = vrcp.pop %v1313
        %v1332 = vmul.f32 1.0, %v1331
        %v1333 = vrcp.pop %v1314
        %v1334 = vmul.f32 1.0, %v1333
        %v1335 = vrcp.pop %v1315
        %v1336 = vmul.f32 1.0, %v1335
        %v1337 = vrcp.pop %v1316
        %v1338 = vmul.f32 1.0, %v1337
        %v1339 = vrcp.pop %v1317
        %v1340 = vmul.f32 1.0, %v1339
        %v1341 = vrcp.pop %v1318
        %v1342 = vmul.f32 1.0, %v1341
        %v1343 = vrcp.pop %v1319
        %v1344 = vmul.f32 1.0, %v1343
        %v1345 = vrcp.pop %v1320
        %v1346 = vmul.f32 1.0, %v1345
        %v1347 = vrcp.pop %v1321
        %v1348 = vmul.f32 1.0, %v1347
        %v1349 = vrcp.pop %v1322
        %v1350 = vmul.f32 1.0, %v1349
        %v1351 = vrcp.pop %v1323
        %v1352 = vmul.f32 1.0, %v1351
        %v1353 = vrcp.pop %v1324
        %v1354 = vmul.f32 1.0, %v1353
        %v1355 = vrcp.pop %v1325
        %v1356 = vmul.f32 1.0, %v1355
        %v1357 = vrcp.pop %v1326
        %v1358 = vmul.f32 1.0, %v1357
        %v1359 = vld [vmem:[%s7] sm:$0x1]
        %v1361 = vlaneseq
        %v1362 = vshrl.u32 %v1361, 7
        %v1363 = vsub.s32 0, %v1362
        %v1364 = vrot.slane %v1359, %v1363
        %v1366 = vmul.f32 %v1123, %v1364
        %v1367 = vmul.f32 %v1126, %v1364
        %v1368 = vmul.f32 %v1131, %v1364
        %v1369 = vmul.f32 %v1134, %v1364
        %v1370 = vmul.f32 %v1139, %v1364
        %v1371 = vmul.f32 %v1142, %v1364
        %v1372 = vmul.f32 %v1147, %v1364
        %v1373 = vmul.f32 %v1150, %v1364
        %v1374 = vmul.f32 %v1155, %v1364
        %v1375 = vmul.f32 %v1158, %v1364
        %v1376 = vmul.f32 %v1163, %v1364
        %v1377 = vmul.f32 %v1166, %v1364
        %v1378 = vmul.f32 %v1171, %v1364
        %v1379 = vmul.f32 %v1174, %v1364
        %v1380 = vmul.f32 %v1179, %v1364
        %v1381 = vmul.f32 %v1182, %v1364
        %1382 = vadd.xlane.f32.xlu0 %v1366
        %v1383 = vpop.xlane.xlu0 %1382
        %1384 = vadd.xlane.f32.xlu0 %v1367
        %v1385 = vpop.xlane.xlu0 %1384
        %1386 = vadd.xlane.f32.xlu0 %v1368
        %v1387 = vpop.xlane.xlu0 %1386
        %1388 = vadd.xlane.f32.xlu0 %v1369
        %v1389 = vpop.xlane.xlu0 %1388
        %1390 = vadd.xlane.f32.xlu0 %v1370
        %v1391 = vpop.xlane.xlu0 %1390
        %1392 = vadd.xlane.f32.xlu0 %v1371
        %v1393 = vpop.xlane.xlu0 %1392
        %1394 = vadd.xlane.f32.xlu0 %v1372
        %v1395 = vpop.xlane.xlu0 %1394
        %1396 = vadd.xlane.f32.xlu0 %v1373
        %v1397 = vpop.xlane.xlu0 %1396
        %1398 = vadd.xlane.f32.xlu0 %v1374
        %v1399 = vpop.xlane.xlu0 %1398
        %1400 = vadd.xlane.f32.xlu0 %v1375
        %v1401 = vpop.xlane.xlu0 %1400
        %1402 = vadd.xlane.f32.xlu0 %v1376
        %v1403 = vpop.xlane.xlu0 %1402
        %1404 = vadd.xlane.f32.xlu0 %v1377
        %v1405 = vpop.xlane.xlu0 %1404
        %1406 = vadd.xlane.f32.xlu0 %v1378
        %v1407 = vpop.xlane.xlu0 %1406
        %1408 = vadd.xlane.f32.xlu0 %v1379
        %v1409 = vpop.xlane.xlu0 %1408
        %1410 = vadd.xlane.f32.xlu0 %v1380
        %v1411 = vpop.xlane.xlu0 %1410
        %1412 = vadd.xlane.f32.xlu0 %v1381
        %v1413 = vpop.xlane.xlu0 %1412
        %v1414 = vadd.f32 %v1383, %v1245
        %v1415 = vadd.f32 %v1385, %v1245
        %v1416 = vadd.f32 %v1387, %v1245
        %v1417 = vadd.f32 %v1389, %v1245
        %v1418 = vadd.f32 %v1391, %v1245
        %v1419 = vadd.f32 %v1393, %v1245
        %v1420 = vadd.f32 %v1395, %v1245
        %v1421 = vadd.f32 %v1397, %v1245
        %v1422 = vadd.f32 %v1399, %v1245
        %v1423 = vadd.f32 %v1401, %v1245
        %v1424 = vadd.f32 %v1403, %v1245
        %v1425 = vadd.f32 %v1405, %v1245
        %v1426 = vadd.f32 %v1407, %v1245
        %v1427 = vadd.f32 %v1409, %v1245
        %v1428 = vadd.f32 %v1411, %v1245
        %v1429 = vadd.f32 %v1413, %v1245
        %v1430 = vxor.u32 %v1414, 2147483648
        %v1431 = vxor.u32 %v1415, 2147483648
        %v1432 = vxor.u32 %v1416, 2147483648
        %v1433 = vxor.u32 %v1417, 2147483648
        %v1434 = vxor.u32 %v1418, 2147483648
        %v1435 = vxor.u32 %v1419, 2147483648
        %v1436 = vxor.u32 %v1420, 2147483648
        %v1437 = vxor.u32 %v1421, 2147483648
        %v1438 = vxor.u32 %v1422, 2147483648
        %v1439 = vxor.u32 %v1423, 2147483648
        %v1440 = vxor.u32 %v1424, 2147483648
        %v1441 = vxor.u32 %v1425, 2147483648
        %v1442 = vxor.u32 %v1426, 2147483648
        %v1443 = vxor.u32 %v1427, 2147483648
        %v1444 = vxor.u32 %v1428, 2147483648
        %v1445 = vxor.u32 %v1429, 2147483648
        %v1446 = vmul.f32 %v1430, 1.442695
        %v1447 = vpow.pop %v1446
        %v1448 = vmul.f32 %v1431, 1.442695
        %v1449 = vpow.pop %v1448
        %v1450 = vmul.f32 %v1432, 1.442695
        %v1451 = vpow.pop %v1450
        %v1452 = vmul.f32 %v1433, 1.442695
        %v1453 = vpow.pop %v1452
        %v1454 = vmul.f32 %v1434, 1.442695
        %v1455 = vpow.pop %v1454
        %v1456 = vmul.f32 %v1435, 1.442695
        %v1457 = vpow.pop %v1456
        %v1458 = vmul.f32 %v1436, 1.442695
        %v1459 = vpow.pop %v1458
        %v1460 = vmul.f32 %v1437, 1.442695
        %v1461 = vpow.pop %v1460
        %v1462 = vmul.f32 %v1438, 1.442695
        %v1463 = vpow.pop %v1462
        %v1464 = vmul.f32 %v1439, 1.442695
        %v1465 = vpow.pop %v1464
        %v1466 = vmul.f32 %v1440, 1.442695
        %v1467 = vpow.pop %v1466
        %v1468 = vmul.f32 %v1441, 1.442695
        %v1469 = vpow.pop %v1468
        %v1470 = vmul.f32 %v1442, 1.442695
        %v1471 = vpow.pop %v1470
        %v1472 = vmul.f32 %v1443, 1.442695
        %v1473 = vpow.pop %v1472
        %v1474 = vmul.f32 %v1444, 1.442695
        %v1475 = vpow.pop %v1474
        %v1476 = vmul.f32 %v1445, 1.442695
        %v1477 = vpow.pop %v1476
        %v1478 = vadd.f32 %v1447, 1.0
        %v1479 = vadd.f32 %v1449, 1.0
        %v1480 = vadd.f32 %v1451, 1.0
        %v1481 = vadd.f32 %v1453, 1.0
        %v1482 = vadd.f32 %v1455, 1.0
        %v1483 = vadd.f32 %v1457, 1.0
        %v1484 = vadd.f32 %v1459, 1.0
        %v1485 = vadd.f32 %v1461, 1.0
        %v1486 = vadd.f32 %v1463, 1.0
        %v1487 = vadd.f32 %v1465, 1.0
        %v1488 = vadd.f32 %v1467, 1.0
        %v1489 = vadd.f32 %v1469, 1.0
        %v1490 = vadd.f32 %v1471, 1.0
        %v1491 = vadd.f32 %v1473, 1.0
        %v1492 = vadd.f32 %v1475, 1.0
        %v1493 = vadd.f32 %v1477, 1.0
        %v1494 = vrcp.pop %v1478
        %v1495 = vmul.f32 1.0, %v1494
        %v1496 = vrcp.pop %v1479
        %v1497 = vmul.f32 1.0, %v1496
        %v1498 = vrcp.pop %v1480
        %v1499 = vmul.f32 1.0, %v1498
        %v1500 = vrcp.pop %v1481
        %v1501 = vmul.f32 1.0, %v1500
        %v1502 = vrcp.pop %v1482
        %v1503 = vmul.f32 1.0, %v1502
        %v1504 = vrcp.pop %v1483
        %v1505 = vmul.f32 1.0, %v1504
        %v1506 = vrcp.pop %v1484
        %v1507 = vmul.f32 1.0, %v1506
        %v1508 = vrcp.pop %v1485
        %v1509 = vmul.f32 1.0, %v1508
        %v1510 = vrcp.pop %v1486
        %v1511 = vmul.f32 1.0, %v1510
        %v1512 = vrcp.pop %v1487
        %v1513 = vmul.f32 1.0, %v1512
        %v1514 = vrcp.pop %v1488
        %v1515 = vmul.f32 1.0, %v1514
        %v1516 = vrcp.pop %v1489
        %v1517 = vmul.f32 1.0, %v1516
        %v1518 = vrcp.pop %v1490
        %v1519 = vmul.f32 1.0, %v1518
        %v1520 = vrcp.pop %v1491
        %v1521 = vmul.f32 1.0, %v1520
        %v1522 = vrcp.pop %v1492
        %v1523 = vmul.f32 1.0, %v1522
        %v1524 = vrcp.pop %v1493
        %v1525 = vmul.f32 1.0, %v1524
        %1527 = vset.pattern.permute.xlu0 0
        %1528 = vperm.xlu0 %1527, %v1328
        %v1529 = vpop.permute.xlu0 %1528
        %1532 = vset.pattern.permute.xlu0 0
        %1533 = vperm.xlu0 %1532, %v1330
        %v1534 = vpop.permute.xlu0 %1533
        %1537 = vset.pattern.permute.xlu0 0
        %1538 = vperm.xlu0 %1537, %v1332
        %v1539 = vpop.permute.xlu0 %1538
        %1542 = vset.pattern.permute.xlu0 0
        %1543 = vperm.xlu0 %1542, %v1334
        %v1544 = vpop.permute.xlu0 %1543
        %1547 = vset.pattern.permute.xlu0 0
        %1548 = vperm.xlu0 %1547, %v1336
        %v1549 = vpop.permute.xlu0 %1548
        %1552 = vset.pattern.permute.xlu0 0
        %1553 = vperm.xlu0 %1552, %v1338
        %v1554 = vpop.permute.xlu0 %1553
        %1557 = vset.pattern.permute.xlu0 0
        %1558 = vperm.xlu0 %1557, %v1340
        %v1559 = vpop.permute.xlu0 %1558
        %1562 = vset.pattern.permute.xlu0 0
        %1563 = vperm.xlu0 %1562, %v1342
        %v1564 = vpop.permute.xlu0 %1563
        %1567 = vset.pattern.permute.xlu0 0
        %1568 = vperm.xlu0 %1567, %v1344
        %v1569 = vpop.permute.xlu0 %1568
        %1572 = vset.pattern.permute.xlu0 0
        %1573 = vperm.xlu0 %1572, %v1346
        %v1574 = vpop.permute.xlu0 %1573
        %1577 = vset.pattern.permute.xlu0 0
        %1578 = vperm.xlu0 %1577, %v1348
        %v1579 = vpop.permute.xlu0 %1578
        %1582 = vset.pattern.permute.xlu0 0
        %1583 = vperm.xlu0 %1582, %v1350
        %v1584 = vpop.permute.xlu0 %1583
        %1587 = vset.pattern.permute.xlu0 0
        %1588 = vperm.xlu0 %1587, %v1352
        %v1589 = vpop.permute.xlu0 %1588
        %1592 = vset.pattern.permute.xlu0 0
        %1593 = vperm.xlu0 %1592, %v1354
        %v1594 = vpop.permute.xlu0 %1593
        %1597 = vset.pattern.permute.xlu0 0
        %1598 = vperm.xlu0 %1597, %v1356
        %v1599 = vpop.permute.xlu0 %1598
        %1602 = vset.pattern.permute.xlu0 0
        %1603 = vperm.xlu0 %1602, %v1358
        %v1604 = vpop.permute.xlu0 %1603
        %v1606 = vmul.f32 %v914, %v1529
        %v1607 = vmul.f32 %v917, %v1534
        %v1608 = vmul.f32 %v922, %v1539
        %v1609 = vmul.f32 %v925, %v1544
        %v1610 = vmul.f32 %v930, %v1549
        %v1611 = vmul.f32 %v933, %v1554
        %v1612 = vmul.f32 %v938, %v1559
        %v1613 = vmul.f32 %v941, %v1564
        %v1614 = vmul.f32 %v946, %v1569
        %v1615 = vmul.f32 %v949, %v1574
        %v1616 = vmul.f32 %v954, %v1579
        %v1617 = vmul.f32 %v957, %v1584
        %v1618 = vmul.f32 %v962, %v1589
        %v1619 = vmul.f32 %v965, %v1594
        %v1620 = vmul.f32 %v970, %v1599
        %v1621 = vmul.f32 %v973, %v1604
        %1623 = vset.pattern.permute.xlu0 1
        %1624 = vperm.xlu0 %1623, %v1495
        %v1625 = vpop.permute.xlu0 %1624
        %1628 = vset.pattern.permute.xlu0 1
        %1629 = vperm.xlu0 %1628, %v1497
        %v1630 = vpop.permute.xlu0 %1629
        %1633 = vset.pattern.permute.xlu0 1
        %1634 = vperm.xlu0 %1633, %v1499
        %v1635 = vpop.permute.xlu0 %1634
        %1638 = vset.pattern.permute.xlu0 1
        %1639 = vperm.xlu0 %1638, %v1501
        %v1640 = vpop.permute.xlu0 %1639
        %1643 = vset.pattern.permute.xlu0 1
        %1644 = vperm.xlu0 %1643, %v1503
        %v1645 = vpop.permute.xlu0 %1644
        %1648 = vset.pattern.permute.xlu0 1
        %1649 = vperm.xlu0 %1648, %v1505
        %v1650 = vpop.permute.xlu0 %1649
        %1653 = vset.pattern.permute.xlu0 1
        %1654 = vperm.xlu0 %1653, %v1507
        %v1655 = vpop.permute.xlu0 %1654
        %1658 = vset.pattern.permute.xlu0 1
        %1659 = vperm.xlu0 %1658, %v1509
        %v1660 = vpop.permute.xlu0 %1659
        %1663 = vset.pattern.permute.xlu0 1
        %1664 = vperm.xlu0 %1663, %v1511
        %v1665 = vpop.permute.xlu0 %1664
        %1668 = vset.pattern.permute.xlu0 1
        %1669 = vperm.xlu0 %1668, %v1513
        %v1670 = vpop.permute.xlu0 %1669
        %1673 = vset.pattern.permute.xlu0 1
        %1674 = vperm.xlu0 %1673, %v1515
        %v1675 = vpop.permute.xlu0 %1674
        %1678 = vset.pattern.permute.xlu0 1
        %1679 = vperm.xlu0 %1678, %v1517
        %v1680 = vpop.permute.xlu0 %1679
        %1683 = vset.pattern.permute.xlu0 1
        %1684 = vperm.xlu0 %1683, %v1519
        %v1685 = vpop.permute.xlu0 %1684
        %1688 = vset.pattern.permute.xlu0 1
        %1689 = vperm.xlu0 %1688, %v1521
        %v1690 = vpop.permute.xlu0 %1689
        %1693 = vset.pattern.permute.xlu0 1
        %1694 = vperm.xlu0 %1693, %v1523
        %v1695 = vpop.permute.xlu0 %1694
        %1698 = vset.pattern.permute.xlu0 1
        %1699 = vperm.xlu0 %1698, %v1525
        %v1700 = vpop.permute.xlu0 %1699
        %v1702 = vmul.f32 %v1123, %v1625
        %v1703 = vmul.f32 %v1126, %v1630
        %v1704 = vmul.f32 %v1131, %v1635
        %v1705 = vmul.f32 %v1134, %v1640
        %v1706 = vmul.f32 %v1139, %v1645
        %v1707 = vmul.f32 %v1142, %v1650
        %v1708 = vmul.f32 %v1147, %v1655
        %v1709 = vmul.f32 %v1150, %v1660
        %v1710 = vmul.f32 %v1155, %v1665
        %v1711 = vmul.f32 %v1158, %v1670
        %v1712 = vmul.f32 %v1163, %v1675
        %v1713 = vmul.f32 %v1166, %v1680
        %v1714 = vmul.f32 %v1171, %v1685
        %v1715 = vmul.f32 %v1174, %v1690
        %v1716 = vmul.f32 %v1179, %v1695
        %v1717 = vmul.f32 %v1182, %v1700
        %v1718 = vadd.f32 %v1606, %v1702
        %v1719 = vadd.f32 %v1607, %v1703
        %v1720 = vadd.f32 %v1608, %v1704
        %v1721 = vadd.f32 %v1609, %v1705
        %v1722 = vadd.f32 %v1610, %v1706
        %v1723 = vadd.f32 %v1611, %v1707
        %v1724 = vadd.f32 %v1612, %v1708
        %v1725 = vadd.f32 %v1613, %v1709
        %v1726 = vadd.f32 %v1614, %v1710
        %v1727 = vadd.f32 %v1615, %v1711
        %v1728 = vadd.f32 %v1616, %v1712
        %v1729 = vadd.f32 %v1617, %v1713
        %v1730 = vadd.f32 %v1618, %v1714
        %v1731 = vadd.f32 %v1619, %v1715
        %v1732 = vadd.f32 %v1620, %v1716
        %v1733 = vadd.f32 %v1621, %v1717
        %v1734 = vpack.c.bf16 %v1719, %v1718
        %v1735 = vpack.c.bf16 %v1721, %v1720
        %v1736 = vpack.c.bf16 %v1723, %v1722
        %v1737 = vpack.c.bf16 %v1725, %v1724
        %v1738 = vpack.c.bf16 %v1727, %v1726
        %v1739 = vpack.c.bf16 %v1729, %v1728
        %v1740 = vpack.c.bf16 %v1731, %v1730
        %v1741 = vpack.c.bf16 %v1733, %v1732
        %v1742 = vld [vmem:[%s9] sm:$0xf]
        %v1743 = vld [vmem:[%s9 + $0x4] sm:$0xf]
        %v1744 = vld [vmem:[%s9 + $0x8] sm:$0xf]
        %v1745 = vld [vmem:[%s9 + $0xc] sm:$0xf]
        %v1746 = vld [vmem:[%s9 + $0x10] sm:$0xf]
        %v1747 = vld [vmem:[%s9 + $0x14] sm:$0xf]
        %v1748 = vld [vmem:[%s9 + $0x18] sm:$0xf]
        %v1749 = vld [vmem:[%s9 + $0x1c] sm:$0xf]
        %v1750 = vld [vmem:[%s9 + $0x20] sm:$0xf]
        %v1751 = vld [vmem:[%s9 + $0x24] sm:$0xf]
        %v1752 = vld [vmem:[%s9 + $0x28] sm:$0xf]
        %v1753 = vld [vmem:[%s9 + $0x2c] sm:$0xf]
        %v1754 = vld [vmem:[%s9 + $0x30] sm:$0xf]
        %v1755 = vld [vmem:[%s9 + $0x34] sm:$0xf]
        %v1756 = vld [vmem:[%s9 + $0x38] sm:$0xf]
        %v1757 = vld [vmem:[%s9 + $0x3c] sm:$0xf]
        %v1758 = vld [vmem:[%s10] sm:$0x1]
        %v1760 = vlaneseq
        %v1761 = vshrl.u32 %v1760, 7
        %v1762 = vsub.s32 0, %v1761
        %v1763 = vrot.slane %v1758, %v1762
        %v1781 = vunpack.c.l.b16 %v1742
        %v1782 = vunpack.c.l.b16 %v1743
        %v1783 = vunpack.c.l.b16 %v1744
        %v1784 = vunpack.c.l.b16 %v1745
        %v1785 = vunpack.c.l.b16 %v1746
        %v1786 = vunpack.c.l.b16 %v1747
        %v1787 = vunpack.c.l.b16 %v1748
        %v1788 = vunpack.c.l.b16 %v1749
        %v1789 = vunpack.c.l.b16 %v1750
        %v1790 = vunpack.c.l.b16 %v1751
        %v1791 = vunpack.c.l.b16 %v1752
        %v1792 = vunpack.c.l.b16 %v1753
        %v1793 = vunpack.c.l.b16 %v1754
        %v1794 = vunpack.c.l.b16 %v1755
        %v1795 = vunpack.c.l.b16 %v1756
        %v1796 = vunpack.c.l.b16 %v1757
        %v1797 = vpack.c.b16 %v1782, %v1781
        %v1798 = vpack.c.b16 %v1784, %v1783
        %v1799 = vpack.c.b16 %v1786, %v1785
        %v1800 = vpack.c.b16 %v1788, %v1787
        %v1801 = vpack.c.b16 %v1790, %v1789
        %v1802 = vpack.c.b16 %v1792, %v1791
        %v1803 = vpack.c.b16 %v1794, %v1793
        %v1804 = vpack.c.b16 %v1796, %v1795
        %1813 = vmatprep.subr.bf16.mxu0 0
        %1814 = vmatpush1.bf16.msra.mxu0 %v1804
        %1815 = vmatprep.subr.bf16.mxu0 0
        %1816 = vmatpush1.bf16.msra.mxu0 %v1803
        %1817 = vmatprep.subr.bf16.mxu0 0
        %1818 = vmatpush1.bf16.msra.mxu0 %v1802
        %1819 = vmatprep.subr.bf16.mxu0 0
        %1820 = vmatpush1.bf16.msra.mxu0 %v1801
        %1821 = vmatprep.subr.bf16.mxu0 0
        %1822 = vmatpush1.bf16.msra.mxu0 %v1800
        %1823 = vmatprep.subr.bf16.mxu0 0
        %1824 = vmatpush1.bf16.msra.mxu0 %v1799
        %1825 = vmatprep.subr.bf16.mxu0 0
        %1826 = vmatpush1.bf16.msra.mxu0 %v1798
        %1827 = vmatprep.subr.bf16.mxu0 0
        %1828 = vmatpush1.bf16.msra.mxu0 %v1797
        %1829 = vmatprep.subr.bf16.mxu0 0
        %1830 = vmatpush2.bf16.msra.mxu0 0
        %1831 = vmatprep.subr.bf16.mxu0 0
        %1832 = vmatpush2.bf16.msra.mxu0 0
        %1833 = vmatprep.subr.bf16.mxu0 0
        %1834 = vmatpush2.bf16.msra.mxu0 0
        %1835 = vmatprep.subr.bf16.mxu0 0
        %1836 = vmatpush2.bf16.msra.mxu0 0
        %1837 = vmatprep.subr.bf16.mxu0 0
        %1838 = vmatpush2.bf16.msra.mxu0 0
        %1839 = vmatprep.subr.bf16.mxu0 0
        %1840 = vmatpush2.bf16.msra.mxu0 0
        %1841 = vmatprep.subr.bf16.mxu0 0
        %1842 = vmatpush2.bf16.msra.mxu0 0
        %1843 = vmatprep.subr.bf16.mxu0 0
        %1844 = vmatpush2.bf16.msra.mxu0 0
        %1845 = vmatprep.mubr.bf16.mxu0 0
        %1846 = vmatmul.mubr.bf16.gmra.mxu0 %v1734
        %v1847 = vpop.f32.mrf.mxu0
        %v1848 = vadd.f32 %v1763, %v1847
        %v1849 = vpop.f32.mrf.mxu0
        %v1850 = vpop.f32.mrf.mxu0
        %v1851 = vadd.f32 %v1763, %v1850
        %v1852 = vpop.f32.mrf.mxu0
        %1853 = vmatprep.mubr.bf16.mxu0 0
        %1854 = vmatmul.mubr.bf16.gmra.mxu0 %v1735
        %v1855 = vpop.f32.mrf.mxu0
        %v1856 = vadd.f32 %v1763, %v1855
        %v1857 = vpop.f32.mrf.mxu0
        %v1858 = vpop.f32.mrf.mxu0
        %v1859 = vadd.f32 %v1763, %v1858
        %v1860 = vpop.f32.mrf.mxu0
        %1861 = vmatprep.mubr.bf16.mxu0 0
        %1862 = vmatmul.mubr.bf16.gmra.mxu0 %v1736
        %v1863 = vpop.f32.mrf.mxu0
        %v1864 = vadd.f32 %v1763, %v1863
        %v1865 = vpop.f32.mrf.mxu0
        %v1866 = vpop.f32.mrf.mxu0
        %v1867 = vadd.f32 %v1763, %v1866
        %v1868 = vpop.f32.mrf.mxu0
        %1869 = vmatprep.mubr.bf16.mxu0 0
        %1870 = vmatmul.mubr.bf16.gmra.mxu0 %v1737
        %v1871 = vpop.f32.mrf.mxu0
        %v1872 = vadd.f32 %v1763, %v1871
        %v1873 = vpop.f32.mrf.mxu0
        %v1874 = vpop.f32.mrf.mxu0
        %v1875 = vadd.f32 %v1763, %v1874
        %v1876 = vpop.f32.mrf.mxu0
        %1877 = vmatprep.mubr.bf16.mxu0 0
        %1878 = vmatmul.mubr.bf16.gmra.mxu0 %v1738
        %v1879 = vpop.f32.mrf.mxu0
        %v1880 = vadd.f32 %v1763, %v1879
        %v1881 = vpop.f32.mrf.mxu0
        %v1882 = vpop.f32.mrf.mxu0
        %v1883 = vadd.f32 %v1763, %v1882
        %v1884 = vpop.f32.mrf.mxu0
        %1885 = vmatprep.mubr.bf16.mxu0 0
        %1886 = vmatmul.mubr.bf16.gmra.mxu0 %v1739
        %v1887 = vpop.f32.mrf.mxu0
        %v1888 = vadd.f32 %v1763, %v1887
        %v1889 = vpop.f32.mrf.mxu0
        %v1890 = vpop.f32.mrf.mxu0
        %v1891 = vadd.f32 %v1763, %v1890
        %v1892 = vpop.f32.mrf.mxu0
        %1893 = vmatprep.mubr.bf16.mxu0 0
        %1894 = vmatmul.mubr.bf16.gmra.mxu0 %v1740
        %v1895 = vpop.f32.mrf.mxu0
        %v1896 = vadd.f32 %v1763, %v1895
        %v1897 = vpop.f32.mrf.mxu0
        %v1898 = vpop.f32.mrf.mxu0
        %v1899 = vadd.f32 %v1763, %v1898
        %v1900 = vpop.f32.mrf.mxu0
        %1901 = vmatprep.mubr.bf16.mxu0 0
        %1902 = vmatmul.mubr.bf16.gmra.mxu0 %v1741
        %v1903 = vpop.f32.mrf.mxu0
        %v1904 = vadd.f32 %v1763, %v1903
        %v1905 = vpop.f32.mrf.mxu0
        %v1906 = vpop.f32.mrf.mxu0
        %v1907 = vadd.f32 %v1763, %v1906
        %v1908 = vpop.f32.mrf.mxu0
        %1909 = vdwg.mxu0
        %v1910 = vmax.f32 %v1848, 0.0
        %v1911 = vmax.f32 %v1851, 0.0
        %v1912 = vmax.f32 %v1856, 0.0
        %v1913 = vmax.f32 %v1859, 0.0
        %v1914 = vmax.f32 %v1864, 0.0
        %v1915 = vmax.f32 %v1867, 0.0
        %v1916 = vmax.f32 %v1872, 0.0
        %v1917 = vmax.f32 %v1875, 0.0
        %v1918 = vmax.f32 %v1880, 0.0
        %v1919 = vmax.f32 %v1883, 0.0
        %v1920 = vmax.f32 %v1888, 0.0
        %v1921 = vmax.f32 %v1891, 0.0
        %v1922 = vmax.f32 %v1896, 0.0
        %v1923 = vmax.f32 %v1899, 0.0
        %v1924 = vmax.f32 %v1904, 0.0
        %v1925 = vmax.f32 %v1907, 0.0
        %s1926 = smul.u32 %s718, 128
        %v1927 = vlaneseq
        %v1928 = vshrl.u32 %v1927, 7
        %v1929 = vadd.s32 %v1928, 8
        %v1930 = vadd.s32 %v1928, 16
        %v1931 = vadd.s32 %v1928, 24
        %v1932 = vadd.s32 %v1928, 32
        %v1933 = vadd.s32 %v1928, 40
        %v1934 = vadd.s32 %v1928, 48
        %v1935 = vadd.s32 %v1928, 56
        %v1936 = vadd.s32 %v1928, 64
        %v1937 = vadd.s32 %v1928, 72
        %v1938 = vadd.s32 %v1928, 80
        %v1939 = vadd.s32 %v1928, 88
        %v1940 = vadd.s32 %v1928, 96
        %v1941 = vadd.s32 %v1928, 104
        %v1942 = vadd.s32 %v1928, 112
        %v1943 = vadd.s32 %v1928, 120
        %v1944 = vstv %s1926
        %v1945 = vadd.s32 %v1944, %v1928
        %v1946 = vadd.s32 %v1944, %v1929
        %v1947 = vadd.s32 %v1944, %v1930
        %v1948 = vadd.s32 %v1944, %v1931
        %v1949 = vadd.s32 %v1944, %v1932
        %v1950 = vadd.s32 %v1944, %v1933
        %v1951 = vadd.s32 %v1944, %v1934
        %v1952 = vadd.s32 %v1944, %v1935
        %v1953 = vadd.s32 %v1944, %v1936
        %v1954 = vadd.s32 %v1944, %v1937
        %v1955 = vadd.s32 %v1944, %v1938
        %v1956 = vadd.s32 %v1944, %v1939
        %v1957 = vadd.s32 %v1944, %v1940
        %v1958 = vadd.s32 %v1944, %v1941
        %v1959 = vadd.s32 %v1944, %v1942
        %v1960 = vadd.s32 %v1944, %v1943
        %vm1961 = vcmp.lt.s32.totalorder %v1945, 200
        %vm1962 = vcmp.lt.s32.totalorder %v1946, 200
        %vm1963 = vcmp.lt.s32.totalorder %v1947, 200
        %vm1964 = vcmp.lt.s32.totalorder %v1948, 200
        %vm1965 = vcmp.lt.s32.totalorder %v1949, 200
        %vm1966 = vcmp.lt.s32.totalorder %v1950, 200
        %vm1967 = vcmp.lt.s32.totalorder %v1951, 200
        %vm1968 = vcmp.lt.s32.totalorder %v1952, 200
        %vm1969 = vcmp.lt.s32.totalorder %v1953, 200
        %vm1970 = vcmp.lt.s32.totalorder %v1954, 200
        %vm1971 = vcmp.lt.s32.totalorder %v1955, 200
        %vm1972 = vcmp.lt.s32.totalorder %v1956, 200
        %vm1973 = vcmp.lt.s32.totalorder %v1957, 200
        %vm1974 = vcmp.lt.s32.totalorder %v1958, 200
        %vm1975 = vcmp.lt.s32.totalorder %v1959, 200
        %vm1976 = vcmp.lt.s32.totalorder %v1960, 200
        %v1977 = vsel %vm1961, 1, 0
        %v1978 = vsel %vm1962, 1, 0
        %v1979 = vsel %vm1963, 1, 0
        %v1980 = vsel %vm1964, 1, 0
        %v1981 = vsel %vm1965, 1, 0
        %v1982 = vsel %vm1966, 1, 0
        %v1983 = vsel %vm1967, 1, 0
        %v1984 = vsel %vm1968, 1, 0
        %v1985 = vsel %vm1969, 1, 0
        %v1986 = vsel %vm1970, 1, 0
        %v1987 = vsel %vm1971, 1, 0
        %v1988 = vsel %vm1972, 1, 0
        %v1989 = vsel %vm1973, 1, 0
        %v1990 = vsel %vm1974, 1, 0
        %v1991 = vsel %vm1975, 1, 0
        %v1992 = vsel %vm1976, 1, 0
        %vm1993 = vcmp.eq.s32.totalorder %v1977, 1
        %vm1994 = vcmp.eq.s32.totalorder %v1978, 1
        %vm1995 = vcmp.eq.s32.totalorder %v1979, 1
        %vm1996 = vcmp.eq.s32.totalorder %v1980, 1
        %vm1997 = vcmp.eq.s32.totalorder %v1981, 1
        %vm1998 = vcmp.eq.s32.totalorder %v1982, 1
        %vm1999 = vcmp.eq.s32.totalorder %v1983, 1
        %vm2000 = vcmp.eq.s32.totalorder %v1984, 1
        %vm2001 = vcmp.eq.s32.totalorder %v1985, 1
        %vm2002 = vcmp.eq.s32.totalorder %v1986, 1
        %vm2003 = vcmp.eq.s32.totalorder %v1987, 1
        %vm2004 = vcmp.eq.s32.totalorder %v1988, 1
        %vm2005 = vcmp.eq.s32.totalorder %v1989, 1
        %vm2006 = vcmp.eq.s32.totalorder %v1990, 1
        %vm2007 = vcmp.eq.s32.totalorder %v1991, 1
        %vm2008 = vcmp.eq.s32.totalorder %v1992, 1
        %v2009 = vsel %vm1993, %v1910, 0.0
        %v2010 = vsel %vm1994, %v1911, 0.0
        %v2011 = vsel %vm1995, %v1912, 0.0
        %v2012 = vsel %vm1996, %v1913, 0.0
        %v2013 = vsel %vm1997, %v1914, 0.0
        %v2014 = vsel %vm1998, %v1915, 0.0
        %v2015 = vsel %vm1999, %v1916, 0.0
        %v2016 = vsel %vm2000, %v1917, 0.0
        %v2017 = vsel %vm2001, %v1918, 0.0
        %v2018 = vsel %vm2002, %v1919, 0.0
        %v2019 = vsel %vm2003, %v1920, 0.0
        %v2020 = vsel %vm2004, %v1921, 0.0
        %v2021 = vsel %vm2005, %v1922, 0.0
        %v2022 = vsel %vm2006, %v1923, 0.0
        %v2023 = vsel %vm2007, %v1924, 0.0
        %v2024 = vsel %vm2008, %v1925, 0.0
        %v2025 = vpack.c.bf16 %v2010, %v2009
        %v2026 = vpack.c.bf16 %v2012, %v2011
        %v2027 = vpack.c.bf16 %v2014, %v2013
        %v2028 = vpack.c.bf16 %v2016, %v2015
        %v2029 = vpack.c.bf16 %v2018, %v2017
        %v2030 = vpack.c.bf16 %v2020, %v2019
        %v2031 = vpack.c.bf16 %v2022, %v2021
        %v2032 = vpack.c.bf16 %v2024, %v2023
        %v2033 = vld [vmem:[%s11] sm:$0xff]
        %v2034 = vld [vmem:[%s11 + $0x8] sm:$0xff]
        %v2035 = vld [vmem:[%s11 + $0x10] sm:$0xff]
        %v2036 = vld [vmem:[%s11 + $0x18] sm:$0xff]
        %v2037 = vld [vmem:[%s11 + $0x20] sm:$0xff]
        %v2038 = vld [vmem:[%s11 + $0x28] sm:$0xff]
        %v2039 = vld [vmem:[%s11 + $0x30] sm:$0xff]
        %v2040 = vld [vmem:[%s11 + $0x38] sm:$0xff]
        %v2041 = vld [vmem:[%s11 + $0x40] sm:$0xff]
        %v2042 = vld [vmem:[%s11 + $0x48] sm:$0xff]
        %v2043 = vld [vmem:[%s11 + $0x50] sm:$0xff]
        %v2044 = vld [vmem:[%s11 + $0x58] sm:$0xff]
        %v2045 = vld [vmem:[%s11 + $0x60] sm:$0xff]
        %v2046 = vld [vmem:[%s11 + $0x68] sm:$0xff]
        %v2047 = vld [vmem:[%s11 + $0x70] sm:$0xff]
        %v2048 = vld [vmem:[%s11 + $0x78] sm:$0xff]
        %v2049 = vld [vmem:[%s12] sm:$0x3]
        %v2051 = vlaneseq
        %v2052 = vshrl.u32 %v2051, 7
        %v2053 = vsub.s32 0, %v2052
        %v2054 = vrot.slane %v2049, %v2053
        %v2055 = vlaneseq
        %v2056 = vshrl.u32 %v2055, 7
        %v2057 = vsub.s32 1, %v2056
        %v2058 = vrot.slane %v2049, %v2057
        %v2077 = vunpack.c.l.b16 %v2033
        %v2078 = vunpack.c.h.b16 %v2033
        %v2079 = vunpack.c.l.b16 %v2034
        %v2080 = vunpack.c.h.b16 %v2034
        %v2081 = vunpack.c.l.b16 %v2035
        %v2082 = vunpack.c.h.b16 %v2035
        %v2083 = vunpack.c.l.b16 %v2036
        %v2084 = vunpack.c.h.b16 %v2036
        %v2085 = vunpack.c.l.b16 %v2037
        %v2086 = vunpack.c.h.b16 %v2037
        %v2087 = vunpack.c.l.b16 %v2038
        %v2088 = vunpack.c.h.b16 %v2038
        %v2089 = vunpack.c.l.b16 %v2039
        %v2090 = vunpack.c.h.b16 %v2039
        %v2091 = vunpack.c.l.b16 %v2040
        %v2092 = vunpack.c.h.b16 %v2040
        %v2093 = vunpack.c.l.b16 %v2041
        %v2094 = vunpack.c.h.b16 %v2041
        %v2095 = vunpack.c.l.b16 %v2042
        %v2096 = vunpack.c.h.b16 %v2042
        %v2097 = vunpack.c.l.b16 %v2043
        %v2098 = vunpack.c.h.b16 %v2043
        %v2099 = vunpack.c.l.b16 %v2044
        %v2100 = vunpack.c.h.b16 %v2044
        %v2101 = vunpack.c.l.b16 %v2045
        %v2102 = vunpack.c.h.b16 %v2045
        %v2103 = vunpack.c.l.b16 %v2046
        %v2104 = vunpack.c.h.b16 %v2046
        %v2105 = vunpack.c.l.b16 %v2047
        %v2106 = vunpack.c.h.b16 %v2047
        %v2107 = vunpack.c.l.b16 %v2048
        %v2108 = vunpack.c.h.b16 %v2048
        %v2109 = vpack.c.b16 %v2079, %v2077
        %v2110 = vpack.c.b16 %v2080, %v2078
        %v2111 = vpack.c.b16 %v2083, %v2081
        %v2112 = vpack.c.b16 %v2084, %v2082
        %v2113 = vpack.c.b16 %v2087, %v2085
        %v2114 = vpack.c.b16 %v2088, %v2086
        %v2115 = vpack.c.b16 %v2091, %v2089
        %v2116 = vpack.c.b16 %v2092, %v2090
        %v2117 = vpack.c.b16 %v2095, %v2093
        %v2118 = vpack.c.b16 %v2096, %v2094
        %v2119 = vpack.c.b16 %v2099, %v2097
        %v2120 = vpack.c.b16 %v2100, %v2098
        %v2121 = vpack.c.b16 %v2103, %v2101
        %v2122 = vpack.c.b16 %v2104, %v2102
        %v2123 = vpack.c.b16 %v2107, %v2105
        %v2124 = vpack.c.b16 %v2108, %v2106
        %2141 = vmatprep.subr.bf16.mxu0 %v2124
        %2142 = vmatpush1.bf16.msra.mxu0 %v2123
        %2143 = vmatprep.subr.bf16.mxu0 %v2122
        %2144 = vmatpush1.bf16.msra.mxu0 %v2121
        %2145 = vmatprep.subr.bf16.mxu0 %v2120
        %2146 = vmatpush1.bf16.msra.mxu0 %v2119
        %2147 = vmatprep.subr.bf16.mxu0 %v2118
        %2148 = vmatpush1.bf16.msra.mxu0 %v2117
        %2149 = vmatprep.subr.bf16.mxu0 %v2116
        %2150 = vmatpush1.bf16.msra.mxu0 %v2115
        %2151 = vmatprep.subr.bf16.mxu0 %v2114
        %2152 = vmatpush1.bf16.msra.mxu0 %v2113
        %2153 = vmatprep.subr.bf16.mxu0 %v2112
        %2154 = vmatpush1.bf16.msra.mxu0 %v2111
        %2155 = vmatprep.subr.bf16.mxu0 %v2110
        %2156 = vmatpush1.bf16.msra.mxu0 %v2109
        %2157 = vmatprep.subr.bf16.mxu0 0
        %2158 = vmatpush2.bf16.msra.mxu0 0
        %2159 = vmatprep.subr.bf16.mxu0 0
        %2160 = vmatpush2.bf16.msra.mxu0 0
        %2161 = vmatprep.subr.bf16.mxu0 0
        %2162 = vmatpush2.bf16.msra.mxu0 0
        %2163 = vmatprep.subr.bf16.mxu0 0
        %2164 = vmatpush2.bf16.msra.mxu0 0
        %2165 = vmatprep.subr.bf16.mxu0 0
        %2166 = vmatpush2.bf16.msra.mxu0 0
        %2167 = vmatprep.subr.bf16.mxu0 0
        %2168 = vmatpush2.bf16.msra.mxu0 0
        %2169 = vmatprep.subr.bf16.mxu0 0
        %2170 = vmatpush2.bf16.msra.mxu0 0
        %2171 = vmatprep.subr.bf16.mxu0 0
        %2172 = vmatpush2.bf16.msra.mxu0 0
        %2173 = vmatprep.mubr.bf16.mxu0 0
        %2174 = vmatmul.mubr.bf16.gmra.mxu0 %v2025
        %v2175 = vpop.f32.mrf.mxu0
        %v2176 = vadd.f32 %v2054, %v2175
        %v2177 = vpop.f32.mrf.mxu0
        %v2178 = vadd.f32 %v2058, %v2177
        %v2179 = vpop.f32.mrf.mxu0
        %v2180 = vadd.f32 %v2054, %v2179
        %v2181 = vpop.f32.mrf.mxu0
        %v2182 = vadd.f32 %v2058, %v2181
        %2183 = vmatprep.mubr.bf16.mxu0 0
        %2184 = vmatmul.mubr.bf16.gmra.mxu0 %v2026
        %v2185 = vpop.f32.mrf.mxu0
        %v2186 = vadd.f32 %v2054, %v2185
        %v2187 = vpop.f32.mrf.mxu0
        %v2188 = vadd.f32 %v2058, %v2187
        %v2189 = vpop.f32.mrf.mxu0
        %v2190 = vadd.f32 %v2054, %v2189
        %v2191 = vpop.f32.mrf.mxu0
        %v2192 = vadd.f32 %v2058, %v2191
        %2193 = vmatprep.mubr.bf16.mxu0 0
        %2194 = vmatmul.mubr.bf16.gmra.mxu0 %v2027
        %v2195 = vpop.f32.mrf.mxu0
        %v2196 = vadd.f32 %v2054, %v2195
        %v2197 = vpop.f32.mrf.mxu0
        %v2198 = vadd.f32 %v2058, %v2197
        %v2199 = vpop.f32.mrf.mxu0
        %v2200 = vadd.f32 %v2054, %v2199
        %v2201 = vpop.f32.mrf.mxu0
        %v2202 = vadd.f32 %v2058, %v2201
        %2203 = vmatprep.mubr.bf16.mxu0 0
        %2204 = vmatmul.mubr.bf16.gmra.mxu0 %v2028
        %v2205 = vpop.f32.mrf.mxu0
        %v2206 = vadd.f32 %v2054, %v2205
        %v2207 = vpop.f32.mrf.mxu0
        %v2208 = vadd.f32 %v2058, %v2207
        %v2209 = vpop.f32.mrf.mxu0
        %v2210 = vadd.f32 %v2054, %v2209
        %v2211 = vpop.f32.mrf.mxu0
        %v2212 = vadd.f32 %v2058, %v2211
        %2213 = vmatprep.mubr.bf16.mxu0 0
        %2214 = vmatmul.mubr.bf16.gmra.mxu0 %v2029
        %v2215 = vpop.f32.mrf.mxu0
        %v2216 = vadd.f32 %v2054, %v2215
        %v2217 = vpop.f32.mrf.mxu0
        %v2218 = vadd.f32 %v2058, %v2217
        %v2219 = vpop.f32.mrf.mxu0
        %v2220 = vadd.f32 %v2054, %v2219
        %v2221 = vpop.f32.mrf.mxu0
        %v2222 = vadd.f32 %v2058, %v2221
        %2223 = vmatprep.mubr.bf16.mxu0 0
        %2224 = vmatmul.mubr.bf16.gmra.mxu0 %v2030
        %v2225 = vpop.f32.mrf.mxu0
        %v2226 = vadd.f32 %v2054, %v2225
        %v2227 = vpop.f32.mrf.mxu0
        %v2228 = vadd.f32 %v2058, %v2227
        %v2229 = vpop.f32.mrf.mxu0
        %v2230 = vadd.f32 %v2054, %v2229
        %v2231 = vpop.f32.mrf.mxu0
        %v2232 = vadd.f32 %v2058, %v2231
        %2233 = vmatprep.mubr.bf16.mxu0 0
        %2234 = vmatmul.mubr.bf16.gmra.mxu0 %v2031
        %v2235 = vpop.f32.mrf.mxu0
        %v2236 = vadd.f32 %v2054, %v2235
        %v2237 = vpop.f32.mrf.mxu0
        %v2238 = vadd.f32 %v2058, %v2237
        %v2239 = vpop.f32.mrf.mxu0
        %v2240 = vadd.f32 %v2054, %v2239
        %v2241 = vpop.f32.mrf.mxu0
        %v2242 = vadd.f32 %v2058, %v2241
        %2243 = vmatprep.mubr.bf16.mxu0 0
        %2244 = vmatmul.mubr.bf16.gmra.mxu0 %v2032
        %v2245 = vpop.f32.mrf.mxu0
        %v2246 = vadd.f32 %v2054, %v2245
        %v2247 = vpop.f32.mrf.mxu0
        %v2248 = vadd.f32 %v2058, %v2247
        %v2249 = vpop.f32.mrf.mxu0
        %v2250 = vadd.f32 %v2054, %v2249
        %v2251 = vpop.f32.mrf.mxu0
        %v2252 = vadd.f32 %v2058, %v2251
        %2253 = vdwg.mxu0
        %v2254 = vtanh.pop %v2176
        %v2255 = vtanh.pop %v2180
        %v2256 = vtanh.pop %v2186
        %v2257 = vtanh.pop %v2190
        %v2258 = vtanh.pop %v2196
        %v2259 = vtanh.pop %v2200
        %v2260 = vtanh.pop %v2206
        %v2261 = vtanh.pop %v2210
        %v2262 = vtanh.pop %v2216
        %v2263 = vtanh.pop %v2220
        %v2264 = vtanh.pop %v2226
        %v2265 = vtanh.pop %v2230
        %v2266 = vtanh.pop %v2236
        %v2267 = vtanh.pop %v2240
        %v2268 = vtanh.pop %v2246
        %v2269 = vtanh.pop %v2250
        %v2270 = vxor.u32 %v2178, 2147483648
        %v2271 = vxor.u32 %v2182, 2147483648
        %v2272 = vxor.u32 %v2188, 2147483648
        %v2273 = vxor.u32 %v2192, 2147483648
        %v2274 = vxor.u32 %v2198, 2147483648
        %v2275 = vxor.u32 %v2202, 2147483648
        %v2276 = vxor.u32 %v2208, 2147483648
        %v2277 = vxor.u32 %v2212, 2147483648
        %v2278 = vxor.u32 %v2218, 2147483648
        %v2279 = vxor.u32 %v2222, 2147483648
        %v2280 = vxor.u32 %v2228, 2147483648
        %v2281 = vxor.u32 %v2232, 2147483648
        %v2282 = vxor.u32 %v2238, 2147483648
        %v2283 = vxor.u32 %v2242, 2147483648
        %v2284 = vxor.u32 %v2248, 2147483648
        %v2285 = vxor.u32 %v2252, 2147483648
        %v2286 = vmul.f32 %v2270, 1.442695
        %v2287 = vpow.pop %v2286
        %v2288 = vmul.f32 %v2271, 1.442695
        %v2289 = vpow.pop %v2288
        %v2290 = vmul.f32 %v2272, 1.442695
        %v2291 = vpow.pop %v2290
        %v2292 = vmul.f32 %v2273, 1.442695
        %v2293 = vpow.pop %v2292
        %v2294 = vmul.f32 %v2274, 1.442695
        %v2295 = vpow.pop %v2294
        %v2296 = vmul.f32 %v2275, 1.442695
        %v2297 = vpow.pop %v2296
        %v2298 = vmul.f32 %v2276, 1.442695
        %v2299 = vpow.pop %v2298
        %v2300 = vmul.f32 %v2277, 1.442695
        %v2301 = vpow.pop %v2300
        %v2302 = vmul.f32 %v2278, 1.442695
        %v2303 = vpow.pop %v2302
        %v2304 = vmul.f32 %v2279, 1.442695
        %v2305 = vpow.pop %v2304
        %v2306 = vmul.f32 %v2280, 1.442695
        %v2307 = vpow.pop %v2306
        %v2308 = vmul.f32 %v2281, 1.442695
        %v2309 = vpow.pop %v2308
        %v2310 = vmul.f32 %v2282, 1.442695
        %v2311 = vpow.pop %v2310
        %v2312 = vmul.f32 %v2283, 1.442695
        %v2313 = vpow.pop %v2312
        %v2314 = vmul.f32 %v2284, 1.442695
        %v2315 = vpow.pop %v2314
        %v2316 = vmul.f32 %v2285, 1.442695
        %v2317 = vpow.pop %v2316
        %v2318 = vadd.f32 %v2287, 1.0
        %v2319 = vadd.f32 %v2289, 1.0
        %v2320 = vadd.f32 %v2291, 1.0
        %v2321 = vadd.f32 %v2293, 1.0
        %v2322 = vadd.f32 %v2295, 1.0
        %v2323 = vadd.f32 %v2297, 1.0
        %v2324 = vadd.f32 %v2299, 1.0
        %v2325 = vadd.f32 %v2301, 1.0
        %v2326 = vadd.f32 %v2303, 1.0
        %v2327 = vadd.f32 %v2305, 1.0
        %v2328 = vadd.f32 %v2307, 1.0
        %v2329 = vadd.f32 %v2309, 1.0
        %v2330 = vadd.f32 %v2311, 1.0
        %v2331 = vadd.f32 %v2313, 1.0
        %v2332 = vadd.f32 %v2315, 1.0
        %v2333 = vadd.f32 %v2317, 1.0
        %v2334 = vrcp.pop %v2318
        %v2335 = vmul.f32 1.0, %v2334
        %v2336 = vrcp.pop %v2319
        %v2337 = vmul.f32 1.0, %v2336
        %v2338 = vrcp.pop %v2320
        %v2339 = vmul.f32 1.0, %v2338
        %v2340 = vrcp.pop %v2321
        %v2341 = vmul.f32 1.0, %v2340
        %v2342 = vrcp.pop %v2322
        %v2343 = vmul.f32 1.0, %v2342
        %v2344 = vrcp.pop %v2323
        %v2345 = vmul.f32 1.0, %v2344
        %v2346 = vrcp.pop %v2324
        %v2347 = vmul.f32 1.0, %v2346
        %v2348 = vrcp.pop %v2325
        %v2349 = vmul.f32 1.0, %v2348
        %v2350 = vrcp.pop %v2326
        %v2351 = vmul.f32 1.0, %v2350
        %v2352 = vrcp.pop %v2327
        %v2353 = vmul.f32 1.0, %v2352
        %v2354 = vrcp.pop %v2328
        %v2355 = vmul.f32 1.0, %v2354
        %v2356 = vrcp.pop %v2329
        %v2357 = vmul.f32 1.0, %v2356
        %v2358 = vrcp.pop %v2330
        %v2359 = vmul.f32 1.0, %v2358
        %v2360 = vrcp.pop %v2331
        %v2361 = vmul.f32 1.0, %v2360
        %v2362 = vrcp.pop %v2332
        %v2363 = vmul.f32 1.0, %v2362
        %v2364 = vrcp.pop %v2333
        %v2365 = vmul.f32 1.0, %v2364
        %v2366 = vmul.f32 %v2254, %v2335
        %v2367 = vmul.f32 %v2255, %v2337
        %v2368 = vmul.f32 %v2256, %v2339
        %v2369 = vmul.f32 %v2257, %v2341
        %v2370 = vmul.f32 %v2258, %v2343
        %v2371 = vmul.f32 %v2259, %v2345
        %v2372 = vmul.f32 %v2260, %v2347
        %v2373 = vmul.f32 %v2261, %v2349
        %v2374 = vmul.f32 %v2262, %v2351
        %v2375 = vmul.f32 %v2263, %v2353
        %v2376 = vmul.f32 %v2264, %v2355
        %v2377 = vmul.f32 %v2265, %v2357
        %v2378 = vmul.f32 %v2266, %v2359
        %v2379 = vmul.f32 %v2267, %v2361
        %v2380 = vmul.f32 %v2268, %v2363
        %v2381 = vmul.f32 %v2269, %v2365
        %v2382 = vld [vmem:[%s13] sm:$0xf]
        %v2383 = vld [vmem:[%s13 + $0x4] sm:$0xf]
        %v2384 = vld [vmem:[%s13 + $0x8] sm:$0xf]
        %v2385 = vld [vmem:[%s13 + $0xc] sm:$0xf]
        %v2386 = vld [vmem:[%s13 + $0x10] sm:$0xf]
        %v2387 = vld [vmem:[%s13 + $0x14] sm:$0xf]
        %v2388 = vld [vmem:[%s13 + $0x18] sm:$0xf]
        %v2389 = vld [vmem:[%s13 + $0x1c] sm:$0xf]
        %v2390 = vld [vmem:[%s13 + $0x20] sm:$0xf]
        %v2391 = vld [vmem:[%s13 + $0x24] sm:$0xf]
        %v2392 = vld [vmem:[%s13 + $0x28] sm:$0xf]
        %v2393 = vld [vmem:[%s13 + $0x2c] sm:$0xf]
        %v2394 = vld [vmem:[%s13 + $0x30] sm:$0xf]
        %v2395 = vld [vmem:[%s13 + $0x34] sm:$0xf]
        %v2396 = vld [vmem:[%s13 + $0x38] sm:$0xf]
        %v2397 = vld [vmem:[%s13 + $0x3c] sm:$0xf]
        %v2398 = vpack.c.bf16 %v2367, %v2366
        %v2399 = vpack.c.bf16 %v2369, %v2368
        %v2400 = vpack.c.bf16 %v2371, %v2370
        %v2401 = vpack.c.bf16 %v2373, %v2372
        %v2402 = vpack.c.bf16 %v2375, %v2374
        %v2403 = vpack.c.bf16 %v2377, %v2376
        %v2404 = vpack.c.bf16 %v2379, %v2378
        %v2405 = vpack.c.bf16 %v2381, %v2380
        %v2406 = vld [vmem:[%s14] sm:$0xff]
        %2408 = vset.pattern.permute.xlu0 0
        %2409 = vperm.xlu0 %2408, %v2406
        %v2410 = vpop.permute.xlu0 %2409
        %v2428 = vunpack.c.l.b16 %v2382
        %v2429 = vunpack.c.l.b16 %v2383
        %v2430 = vunpack.c.l.b16 %v2384
        %v2431 = vunpack.c.l.b16 %v2385
        %v2432 = vunpack.c.l.b16 %v2386
        %v2433 = vunpack.c.l.b16 %v2387
        %v2434 = vunpack.c.l.b16 %v2388
        %v2435 = vunpack.c.l.b16 %v2389
        %v2436 = vunpack.c.l.b16 %v2390
        %v2437 = vunpack.c.l.b16 %v2391
        %v2438 = vunpack.c.l.b16 %v2392
        %v2439 = vunpack.c.l.b16 %v2393
        %v2440 = vunpack.c.l.b16 %v2394
        %v2441 = vunpack.c.l.b16 %v2395
        %v2442 = vunpack.c.l.b16 %v2396
        %v2443 = vunpack.c.l.b16 %v2397
        %v2444 = vpack.c.b16 %v2429, %v2428
        %v2445 = vpack.c.b16 %v2431, %v2430
        %v2446 = vpack.c.b16 %v2433, %v2432
        %v2447 = vpack.c.b16 %v2435, %v2434
        %v2448 = vpack.c.b16 %v2437, %v2436
        %v2449 = vpack.c.b16 %v2439, %v2438
        %v2450 = vpack.c.b16 %v2441, %v2440
        %v2451 = vpack.c.b16 %v2443, %v2442
        %2460 = vxpose.xlu0.c.b16.start [1/8] %v2444, 128
        %2461 = vxpose.xlu0.c.b16.cont [2/8] %v2445, 128
        %2462 = vxpose.xlu0.c.b16.cont [3/8] %v2446, 128
        %2463 = vxpose.xlu0.c.b16.cont [4/8] %v2447, 128
        %2464 = vxpose.xlu0.c.b16.cont [5/8] %v2448, 128
        %2465 = vxpose.xlu0.c.b16.cont [6/8] %v2449, 128
        %2466 = vxpose.xlu0.c.b16.cont [7/8] %v2450, 128
        %2467 = vxpose.xlu0.c.b16.end [8/8] %v2451, 128
        %v2468 = vpop.trf.xlu0
        %v2469 = vpop.trf.xlu0
        %v2470 = vpop.trf.xlu0
        %v2471 = vpop.trf.xlu0
        %v2472 = vpop.trf.xlu0
        %v2473 = vpop.trf.xlu0
        %v2474 = vpop.trf.xlu0
        %v2475 = vpop.trf.xlu0
        %2476 = vmatprep.subr.bf16.mxu0 0
        %2477 = vmatpush1.bf16.xpose.msra.mxu0 %v2405
        %2478 = vmatprep.subr.bf16.mxu0 0
        %2479 = vmatpush1.bf16.xpose.msra.mxu0 %v2404
        %2480 = vmatprep.subr.bf16.mxu0 0
        %2481 = vmatpush1.bf16.xpose.msra.mxu0 %v2403
        %2482 = vmatprep.subr.bf16.mxu0 0
        %2483 = vmatpush1.bf16.xpose.msra.mxu0 %v2402
        %2484 = vmatprep.subr.bf16.mxu0 0
        %2485 = vmatpush1.bf16.xpose.msra.mxu0 %v2401
        %2486 = vmatprep.subr.bf16.mxu0 0
        %2487 = vmatpush1.bf16.xpose.msra.mxu0 %v2400
        %2488 = vmatprep.subr.bf16.mxu0 0
        %2489 = vmatpush1.bf16.xpose.msra.mxu0 %v2399
        %2490 = vmatprep.subr.bf16.mxu0 0
        %2491 = vmatpush1.bf16.xpose.msra.mxu0 %v2398
        %2492 = vmatprep.subr.bf16.mxu0 0
        %2493 = vmatpush2.bf16.xpose.msra.mxu0 0
        %2494 = vmatprep.subr.bf16.mxu0 0
        %2495 = vmatpush2.bf16.xpose.msra.mxu0 0
        %2496 = vmatprep.subr.bf16.mxu0 0
        %2497 = vmatpush2.bf16.xpose.msra.mxu0 0
        %2498 = vmatprep.subr.bf16.mxu0 0
        %2499 = vmatpush2.bf16.xpose.msra.mxu0 0
        %2500 = vmatprep.subr.bf16.mxu0 0
        %2501 = vmatpush2.bf16.xpose.msra.mxu0 0
        %2502 = vmatprep.subr.bf16.mxu0 0
        %2503 = vmatpush2.bf16.xpose.msra.mxu0 0
        %2504 = vmatprep.subr.bf16.mxu0 0
        %2505 = vmatpush2.bf16.xpose.msra.mxu0 0
        %2506 = vmatprep.subr.bf16.mxu0 0
        %2507 = vmatpush2.bf16.xpose.msra.mxu0 0
        %2508 = vmatprep.mubr.bf16.mxu0 0
        %2509 = vmatmul.mubr.bf16.gmra.mxu0 %v2468
        %v2510 = vpop.f32.mrf.mxu0
        %v2511 = vadd.f32 %v2410, %v2510
        %v2512 = vpop.f32.mrf.mxu0
        %v2513 = vpop.f32.mrf.mxu0
        %v2514 = vpop.f32.mrf.mxu0
        %2515 = vdwg.mxu0
        %v2516 = vlaneseq
        %v2517 = vand.u32 %v2516, 127
        %v2518 = vadd.s32 %v1944, %v2517
        %vm2519 = vcmp.lt.s32.totalorder %v2518, 200
        %v2520 = vsel %vm2519, %v2511, -1e+30
        %2521 = vst [vmem:[%s652] sm:$0xff] %v2520
        %v2522 = vld [vmem:[%s711] sm:$0xff]
        %2523 = vmax.xlane.f32.xlu0 %v2520
        %v2524 = vpop.xlane.xlu0 %2523
        %v2525 = vmax.f32 %v2522, %v2524
        %v2526 = vsub.f32 %v2522, %v2525
        %v2527 = vmul.f32 %v2526, 1.442695
        %v2528 = vpow.pop %v2527
        %2530 = vset.pattern.permute.xlu0 0
        %2531 = vperm.xlu0 %2530, %v2525
        %v2532 = vpop.permute.xlu0 %2531
        %v2534 = vsub.f32 %v2520, %v2532
        %v2535 = vmul.f32 %v2534, 1.442695
        %v2536 = vpow.pop %v2535
        %v2537 = vld [vmem:[%s715] sm:$0xff]
        %v2538 = vmul.f32 %v2528, %v2537
        %2539 = vadd.xlane.f32.xlu0 %v2536
        %v2540 = vpop.xlane.xlu0 %2539
        %v2541 = vadd.f32 %v2538, %v2540
        %vm2542 = vcmask 7168
        %2543 = vst.msk [vmem:[%s715] sm:$0xff] %vm2542, %v2541
        %v2544 = vld [vmem:[#allocation4] sm:$0xff]
        %2546 = vset.pattern.permute.xlu0 0
        %2547 = vperm.xlu0 %2546, %v2528
        %v2548 = vpop.permute.xlu0 %2547
        %v2550 = vmul.f32 %v2548, %v2544
        %v2551 = vpack.c.bf16 %v2536, %v2536
        %2552 = vmatprep.subr.bf16.mxu0 0
        %2553 = vmatpush1.bf16.msra.mxu0 %v2032
        %2554 = vmatprep.subr.bf16.mxu0 0
        %2555 = vmatpush1.bf16.msra.mxu0 %v2031
        %2556 = vmatprep.subr.bf16.mxu0 0
        %2557 = vmatpush1.bf16.msra.mxu0 %v2030
        %2558 = vmatprep.subr.bf16.mxu0 0
        %2559 = vmatpush1.bf16.msra.mxu0 %v2029
        %2560 = vmatprep.subr.bf16.mxu0 0
        %2561 = vmatpush1.bf16.msra.mxu0 %v2028
        %2562 = vmatprep.subr.bf16.mxu0 0
        %2563 = vmatpush1.bf16.msra.mxu0 %v2027
        %2564 = vmatprep.subr.bf16.mxu0 0
        %2565 = vmatpush1.bf16.msra.mxu0 %v2026
        %2566 = vmatprep.subr.bf16.mxu0 0
        %2567 = vmatpush1.bf16.msra.mxu0 %v2025
        %2568 = vmatprep.subr.bf16.mxu0 0
        %2569 = vmatpush2.bf16.msra.mxu0 0
        %2570 = vmatprep.subr.bf16.mxu0 0
        %2571 = vmatpush2.bf16.msra.mxu0 0
        %2572 = vmatprep.subr.bf16.mxu0 0
        %2573 = vmatpush2.bf16.msra.mxu0 0
        %2574 = vmatprep.subr.bf16.mxu0 0
        %2575 = vmatpush2.bf16.msra.mxu0 0
        %2576 = vmatprep.subr.bf16.mxu0 0
        %2577 = vmatpush2.bf16.msra.mxu0 0
        %2578 = vmatprep.subr.bf16.mxu0 0
        %2579 = vmatpush2.bf16.msra.mxu0 0
        %2580 = vmatprep.subr.bf16.mxu0 0
        %2581 = vmatpush2.bf16.msra.mxu0 0
        %2582 = vmatprep.subr.bf16.mxu0 0
        %2583 = vmatpush2.bf16.msra.mxu0 0
        %2584 = vmatprep.mubr.bf16.mxu0 0
        %2585 = vmatmul.mubr.bf16.gmra.mxu0 %v2551
        %v2586 = vpop.f32.mrf.mxu0
        %v2587 = vadd.f32 0.0, %v2586
        %v2588 = vpop.f32.mrf.mxu0
        %v2589 = vpop.f32.mrf.mxu0
        %v2590 = vpop.f32.mrf.mxu0
        %2591 = vdwg.mxu0
        %v2592 = vadd.f32 %v2550, %v2587
        %2593 = vst [vmem:[#allocation4] sm:$0xff] %v2592
        %2594 = vst.msk [vmem:[%s711] sm:$0xff] %vm2542, %v2525
        %s2595 = sand.u32 %s391, 1
        %s2596 = scalar_lea.sflag [#allocation3], %s2595
        %s2597 = sand.u32 %s391, 1
        %s2598 = smul.addr %s2597, 8
        %s2599 = scalar_lea.vmem [#allocation2], %s2598
        %p2600 = scmp.lt.s32.totalorder %s38, 0
        %s2601 = scalar_select %p2600, %s38, 0
        %s2602 = smul.addr %s2601, 8
        %s2603 = scalar_lea.vmem %s16, %s2602
        %p2604 = scmp.lt.s32.totalorder %s38, 0
        %s2605 = scalar_select %p2604, %s38, 0
        %s2606 = smul.addr %s2605, 8
        %s2607 = scalar_lea.vmem %s17, %s2606
        // Predicated region
        $region85: #{tpu_custom_call.1} parent=79 // pred_check
          %p2608 = pneg %p401
        $region86: #{tpu_custom_call.1} parent=79 // pred_check_branch
          %2610 = sbr.rel (%p2608) target = $region88
        $region87: #{tpu_custom_call.1} parent=79 // pred_region
          %s2611 = smul.u32 %s38, 2
          %s2612 = sadd.s32 %s2611, %s39
          %s2614 = ssub.s32 128, 128
          %2615 = vsyncadd %s2596, %s2614
          %s2616 = smul.addr %s2612, 128
          %s2617 = scalar_lea.hbm %s15, %s2616
          %s2619 = sshll.u32 %s2599, 4
          %s2620 = int_to_ptr.vmem [resolvable:$true] %s2619
          %2622 = dma.vmem_to_hbm [thread:$0]  %s2620, 128, %s2617, %s2596
        $region88: #{tpu_custom_call.1} parent=79 // pred_fallthru
          _
        // Predicated region
        $region89: #{tpu_custom_call.1} parent=79 // pred_check
          %p2623 = pneg %p427
        $region90: #{tpu_custom_call.1} parent=79 // pred_check_branch
          %2625 = sbr.rel (%p2623) target = $region92
        $region91: #{tpu_custom_call.1} parent=79 // pred_region
          _
        $region92: #{tpu_custom_call.1} parent=79 // pred_fallthru
          _
        // Predicated region
        $region93: #{tpu_custom_call.1} parent=79 // pred_check
          %p2626 = pneg %p453
        $region94: #{tpu_custom_call.1} parent=79 // pred_check_branch
          %2628 = sbr.rel (%p2626) target = $region96
        $region95: #{tpu_custom_call.1} parent=79 // pred_region
          _
        $region96: #{tpu_custom_call.1} parent=79 // pred_fallthru
          _
        // Predicated region
        $region97: #{tpu_custom_call.1} parent=79 // pred_check
          %p2629 = pneg %p479
        $region98: #{tpu_custom_call.1} parent=79 // pred_check_branch
          %2631 = sbr.rel (%p2629) target = $region100
        $region99: #{tpu_custom_call.1} parent=79 // pred_region
          %s2633 = ssub.s32 128, 128
          %2634 = vsyncadd [#allocation5], %s2633
          %s2635 = smul.addr %s38, 128
          %s2636 = scalar_lea.hbm %s18, %s2635
          %s2638 = sshll.u32 [#allocation4], 4
          %s2639 = int_to_ptr.vmem [resolvable:$true] %s2638
          %2641 = dma.vmem_to_hbm [thread:$0]  %s2639, 128, %s2636, [#allocation5]
        $region100: #{tpu_custom_call.1} parent=79 // pred_fallthru
          _
        // Predicated region
        $region101: #{tpu_custom_call.1} parent=79 // pred_check
          %p2642 = pneg %p427
        $region102: #{tpu_custom_call.1} parent=79 // pred_check_branch
          %2644 = sbr.rel (%p2642) target = $region104
        $region103: #{tpu_custom_call.1} parent=79 // pred_region
          %p2645 = scmp.lt.s32.totalorder %s38, 0
          %s2646 = scalar_select %p2645, %s38, 0
          %s2647 = smul.addr %s2646, 8
          %s2648 = scalar_lea.vmem %s16, %s2647
        $region104: #{tpu_custom_call.1} parent=79 // pred_fallthru
          _
        // Predicated region
        $region105: #{tpu_custom_call.1} parent=79 // pred_check
          %p2649 = pneg %p453
        $region106: #{tpu_custom_call.1} parent=79 // pred_check_branch
          %2651 = sbr.rel (%p2649) target = $region108
        $region107: #{tpu_custom_call.1} parent=79 // pred_region
          %p2652 = scmp.lt.s32.totalorder %s38, 0
          %s2653 = scalar_select %p2652, %s38, 0
          %s2654 = smul.addr %s2653, 8
          %s2655 = scalar_lea.vmem %s17, %s2654
        $region108: #{tpu_custom_call.1} parent=79 // pred_fallthru
          _
        // Predicated region
        $region109: #{tpu_custom_call.1} parent=79 // pred_check
          %p2656 = pneg %p479
        $region110: #{tpu_custom_call.1} parent=79 // pred_check_branch
          %2658 = sbr.rel (%p2656) target = $region112
        $region111: #{tpu_custom_call.1} parent=79 // pred_region
          %2659 = dma.done [#allocation5], 128
        $region112: #{tpu_custom_call.1} parent=79 // pred_fallthru
          _
      $region80: #{tpu_custom_call.1} parent=5 // pred_fallthru
        _
      %p2660 = scmp.le.s32.totalorder 2, %s29
      // Predicated region
      $region113: #{tpu_custom_call.1} parent=5 // pred_check
        %p2661 = pneg %p2660
      $region114: #{tpu_custom_call.1} parent=5 // pred_check_branch
        %2663 = sbr.rel (%p2661) target = $region116
      $region115: #{tpu_custom_call.1} parent=5 // pred_region
        %s2664 = ssub.s32 %s29, 2
        // Predicated region
        $region117: #{tpu_custom_call.1} parent=115 // pred_check
          %p2665 = pneg %p407
        $region118: #{tpu_custom_call.1} parent=115 // pred_check_branch
          %2667 = sbr.rel (%p2665) target = $region120
        $region119: #{tpu_custom_call.1} parent=115 // pred_region
          %s2668 = sand.u32 %s392, 1
          %s2669 = scalar_lea.sflag [#allocation3], %s2668
          %s2670 = sand.u32 %s392, 1
          %s2671 = smul.addr %s2670, 8
          %s2672 = scalar_lea.vmem [#allocation2], %s2671
          %2673 = dma.done %s2669, 128
        $region120: #{tpu_custom_call.1} parent=115 // pred_fallthru
          _
      $region116: #{tpu_custom_call.1} parent=5 // pred_fallthru
        _
    $region6: #{tpu_custom_call.1} parent=1 // loop_footer
      %s33 = sadd.s32 1, %s29
    $region7: #{tpu_custom_call.1} parent=1 // loop_footer_branch
      %28 = sbr.rel target = $region3
    $region8: #{tpu_custom_call.1} parent=1 // loop_exit
      _
    %2674 = vsyncpa [#allocation3], 1
    %s2675 = scalar_lea.sflag [#allocation3], 1
    %2676 = vsyncpa %s2675, 1
    %2677 = vsyncpa [#allocation5], 1

</llo_original>
